<compile_context>
chip_gen: v7x
topology: tpu7x:2x2x1
jax: 0.10.0
libtpu: 0.0.40
codegen_flags: <defaults>
</compile_context>

<pallas_src>
import functools

import jax
import jax.numpy as jnp
import numpy as np
from jax.experimental import pallas as pl
from jax.experimental.pallas import tpu as pltpu  # noqa: F401  (kept for TPU-specific extensions)


# ----------------------------- packed-parameter layout ------------------------------

def _rup8(n: int) -> int:
    return ((n + 7) // 8) * 8


def _wmat_layout(D, F, H, P, K):
    """Row offsets (all multiples of 8) of each weight inside the packed weight matrix."""
    o_tw = 0                      # trunk_w  (D, F)
    o_ih = o_tw + _rup8(D)        # W_ih^T   (F, 3H)
    o_hh = o_ih + _rup8(F)        # W_hh^T   (H, 3H)
    o_p1 = o_hh + _rup8(H)        # p1_w     (H, P)
    o_p2 = o_p1 + _rup8(H)        # p2_w     (P, K)
    rows = o_p2 + _rup8(P)
    cols = max(F, 3 * H, P, K)
    return o_tw, o_ih, o_hh, o_p1, o_p2, rows, cols


# ----------------------------- fused Pallas kernel ------------------------------

def skill_actor_kernel(x_ref, h0_ref, w_ref, v_ref, out_ref, *, dims):
    """x_ref: (S*Bp, D) time-major, batch-padded observations; Bp % 8 == 0.

    w_ref: packed weights, v_ref: packed bias/LayerNorm vectors (8, L).
    out_ref: (Bp, K+H) = [logits | h_n].
    """
    D, F, H, P, K, S, Bp = dims
    o_tw, o_ih, o_hh, o_p1, o_p2, _, _ = _wmat_layout(D, F, H, P, K)

    # --- unpack weights (static, 8-row-aligned slices of a single VMEM block) ---
    tw = w_ref[o_tw:o_tw + D, 0:F]
    wih = w_ref[o_ih:o_ih + F, 0:3 * H]
    whh = w_ref[o_hh:o_hh + H, 0:3 * H]
    p1w = w_ref[o_p1:o_p1 + H, 0:P]
    p2w = w_ref[o_p2:o_p2 + P, 0:K]

    # --- unpack bias / LayerNorm vectors (one (8, L) tile, read once) ---
    trunk_b = v_ref[0:1, 0:F]
    ln_g = v_ref[1:2, 0:F]
    ln_b = v_ref[2:3, 0:F]
    bih = v_ref[3:4, 0:3 * H]      # b_ih with b_hr, b_hz already folded in
    bhh_n = v_ref[4:5, 0:H]        # b_hn stays separate (multiplied by r)
    p1_b = v_ref[5:6, 0:P]
    p2_b = v_ref[6:7, 0:K]

    # ---- trunk: Linear -> LayerNorm(eps=1e-5) -> Tanh on all S*Bp rows at once ----
    y = jnp.dot(x_ref[...], tw, preferred_element_type=jnp.float32) + trunk_b
    mean = jnp.mean(y, axis=-1, keepdims=True)
    var = jnp.mean(jnp.square(y - mean), axis=-1, keepdims=True)
    feats = jnp.tanh((y - mean) * jax.lax.rsqrt(var + 1e-5) * ln_g + ln_b)

    # ---- hoisted input projection for the whole sequence (off the serial path) ----
    gi_all = jnp.dot(feats, wih, preferred_element_type=jnp.float32) + bih   # (S*Bp, 3H)

    # ---- GRU recurrence: only the h-dependent matmul + gates stay in the loop ----
    h = h0_ref[...]                                                          # (Bp, H)
    for t in range(S):                             # S is small & static -> unrolled
        gi = gi_all[t * Bp:(t + 1) * Bp, :]        # aligned (Bp, 3H) sublane tile
        gh = jnp.dot(h, whh, preferred_element_type=jnp.float32)
        # PyTorch GRU gate order: r, z, n ;  n uses  r * (W_hn h + b_hn)
        r = jax.nn.sigmoid(gi[:, 0:H] + gh[:, 0:H])
        z = jax.nn.sigmoid(gi[:, H:2 * H] + gh[:, H:2 * H])
        n = jnp.tanh(gi[:, 2 * H:3 * H] + r * (gh[:, 2 * H:3 * H] + bhh_n))
        h = (1.0 - z) * n + z * h

    # ---- policy MLP on the final hidden state (== gru_out[:, -1, :]) ----
    h1 = jnp.maximum(jnp.dot(h, p1w, preferred_element_type=jnp.float32) + p1_b, 0.0)
    logits = jnp.dot(h1, p2w, preferred_element_type=jnp.float32) + p2_b

    # single merged output: [logits | h_n]
    out_ref[...] = jnp.concatenate([logits, h], axis=-1)


@functools.partial(jax.jit, static_argnames=("dims",))
def fused_forward(x_tm, h0, wmat, vecs, *, dims):
    """x_tm: (S*Bp, D) time-major padded obs; h0: (Bp, H). Returns (Bp, K+H)."""
    D, F, H, P, K, S, Bp = dims
    kernel = functools.partial(skill_actor_kernel, dims=dims)
    return pl.pallas_call(
        kernel,
        out_shape=jax.ShapeDtypeStruct((Bp, K + H), jnp.float32),
    )(x_tm, h0, wmat, vecs)


# ------------------------------ parameters ----------------------------------

def pack_kernel_params(p, D, F, H, P, K):
    o_tw, o_ih, o_hh, o_p1, o_p2, rows, cols = _wmat_layout(D, F, H, P, K)

    wmat = jnp.zeros((rows, cols), jnp.float32)
    wmat = wmat.at[o_tw:o_tw + D, :F].set(p["trunk_w"])
    wmat = wmat.at[o_ih:o_ih + F, :3 * H].set(p["wih_t"])
    wmat = wmat.at[o_hh:o_hh + H, :3 * H].set(p["whh_t"])
    wmat = wmat.at[o_p1:o_p1 + H, :P].set(p["p1_w"])
    wmat = wmat.at[o_p2:o_p2 + P, :K].set(p["p2_w"])

    # fold b_hr, b_hz into b_ir, b_iz (valid: neither is multiplied by r); keep b_hn.
    bih_folded = p["bih"].at[:, :2 * H].add(p["bhh"][:, :2 * H])

    vecs = jnp.zeros((8, cols), jnp.float32)
    vecs = vecs.at[0, :F].set(p["trunk_b"][0])
    vecs = vecs.at[1, :F].set(p["ln_g"][0])
    vecs = vecs.at[2, :F].set(p["ln_b"][0])
    vecs = vecs.at[3, :3 * H].set(bih_folded[0])
    vecs = vecs.at[4, :H].set(p["bhh"][0, 2 * H:])
    vecs = vecs.at[5, :P].set(p["p1_b"][0])
    vecs = vecs.at[6, :K].set(p["p2_b"][0])
    return wmat, vecs


def init_params(key, obs_dim, skill_dim, feature_dim, hidden_dim, rnn_hidden_dim):
    D, K, F, P, H = obs_dim, skill_dim, feature_dim, hidden_dim, rnn_hidden_dim
    ks = jax.random.split(key, 7)

    def lin_w(k, fan_in, fan_out):
        return (jax.random.normal(k, (fan_in, fan_out), jnp.float32)
                / jnp.sqrt(jnp.float32(fan_in)))

    raw = {
        # trunk: Linear(obs_dim, feature_dim) + LayerNorm(feature_dim)
        "trunk_w": lin_w(ks[0], D, F),
        "trunk_b": jnp.zeros((1, F), jnp.float32),
        "ln_g": jnp.ones((1, F), jnp.float32),
        "ln_b": jnp.zeros((1, F), jnp.float32),
        # GRU weights stored pre-transposed: (in, 3H) / (H, 3H), gate order r,z,n
        "wih_t": lin_w(ks[1], F, 3 * H),
        "whh_t": lin_w(ks[2], H, 3 * H),
        "bih": 0.1 * jax.random.normal(ks[3], (1, 3 * H), jnp.float32),
        "bhh": 0.1 * jax.random.normal(ks[4], (1, 3 * H), jnp.float32),
        # policy MLP
        "p1_w": lin_w(ks[5], H, P),
        "p1_b": jnp.zeros((1, P), jnp.float32),
        "p2_w": lin_w(ks[6], P, K),
        "p2_b": jnp.zeros((1, K), jnp.float32),
    }
    params = dict(raw)
    params["dims"] = (D, F, H, P, K)               # static python ints
    wmat, vecs = pack_kernel_params(raw, D, F, H, P, K)
    params["wmat"] = wmat
    params["vecs"] = vecs
    return params


# ------------------------------ SkillActor forward ---------------------------

def skill_actor_forward(params, obs, hidden=None):
    single = obs.ndim == 2
    if single:
        obs = obs[:, None, :]
    B, S, D = obs.shape
    _, F, H, P, K = params["dims"]

    Bp = _rup8(B)                                   # pad batch to sublane height

    # time-major + batch-pad + flatten: row t*Bp + b corresponds to (time t, batch b).
    obs_tm = jnp.transpose(obs, (1, 0, 2))          # (S, B, D)
    if Bp != B:
        obs_tm = jnp.pad(obs_tm, ((0, 0), (0, Bp - B), (0, 0)))
    x_tm = obs_tm.reshape(S * Bp, D)

    if hidden is None:
        h0 = jnp.zeros((Bp, H), jnp.float32)
    else:
        h0 = hidden[0]
        if Bp != B:
            h0 = jnp.pad(h0, ((0, Bp - B), (0, 0)))

    out = fused_forward(x_tm, h0, params["wmat"], params["vecs"],
                        dims=(D, F, H, P, K, S, Bp))
    logits = out[:B, :K]
    h_n = out[:B, K:K + H]
    return logits if single else (logits, h_n[None])


# ------------------------------ pure-JAX reference ---------------------------

def ref_forward(params, obs, hidden=None):
    single = obs.ndim == 2
    if single:
        obs = obs[:, None, :]
    B, S, D = obs.shape
    H = params["dims"][2]

    x = obs.reshape(B * S, D)
    y = x @ params["trunk_w"] + params["trunk_b"]
    mean = y.mean(-1, keepdims=True)
    var = ((y - mean) ** 2).mean(-1, keepdims=True)
    y = (y - mean) / jnp.sqrt(var + 1e-5) * params["ln_g"] + params["ln_b"]
    feats = jnp.tanh(y).reshape(B, S, -1)

    if hidden is None:
        hidden = jnp.zeros((1, B, H), jnp.float32)

    def step(h, xt):
        gi = xt @ params["wih_t"] + params["bih"]
        gh = h @ params["whh_t"] + params["bhh"]
        r = jax.nn.sigmoid(gi[:, :H] + gh[:, :H])
        z = jax.nn.sigmoid(gi[:, H:2 * H] + gh[:, H:2 * H])
        n = jnp.tanh(gi[:, 2 * H:] + r * gh[:, 2 * H:])
        h_new = (1.0 - z) * n + z * h
        return h_new, h_new

    h_n, outs = jax.lax.scan(step, hidden[0], jnp.transpose(feats, (1, 0, 2)))
    last = outs[-1]
    h1 = jnp.maximum(last @ params["p1_w"] + params["p1_b"], 0.0)
    logits = h1 @ params["p2_w"] + params["p2_b"]
    return logits if single else (logits, h_n[None])


# ----------------------------------- main ------------------------------------

if __name__ == "__main__":
    obs_dim, skill_dim, feature_dim, hidden_dim, rnn_hidden_dim = 24, 16, 32, 32, 32
    batch, seq = 2, 8

    key = jax.random.PRNGKey(0)
    kp, kx = jax.random.split(key)
    params = init_params(kp, obs_dim, skill_dim, feature_dim, hidden_dim, rnn_hidden_dim)
    obs = jax.random.normal(kx, (batch, seq, obs_dim), jnp.float32)

    logits, new_hidden = skill_actor_forward(params, obs, hidden=None)
    logits = jax.block_until_ready(logits)
    new_hidden = jax.block_until_ready(new_hidden)

    ref_logits, ref_hidden = ref_forward(params, obs, hidden=None)
    np.testing.assert_allclose(np.asarray(logits), np.asarray(ref_logits),
                               rtol=1e-4, atol=1e-5)
    np.testing.assert_allclose(np.asarray(new_hidden), np.asarray(ref_hidden),
                               rtol=1e-4, atol=1e-5)

    # explicit-hidden path
    h_in = 0.5 * jax.random.normal(jax.random.PRNGKey(1),
                                   (1, batch, rnn_hidden_dim), jnp.float32)
    l2, h2 = skill_actor_forward(params, obs, hidden=h_in)
    rl2, rh2 = ref_forward(params, obs, hidden=h_in)
    np.testing.assert_allclose(np.asarray(jax.block_until_ready(l2)),
                               np.asarray(rl2), rtol=1e-4, atol=1e-5)
    np.testing.assert_allclose(np.asarray(jax.block_until_ready(h2)),
                               np.asarray(rh2), rtol=1e-4, atol=1e-5)

    # single-observation path (obs.dim() == 2 -> returns logits only)
    logits_single = jax.block_until_ready(skill_actor_forward(params, obs[:, 0, :]))
    ref_single = ref_forward(params, obs[:, 0, :])
    assert logits_single.shape == (batch, skill_dim)
    np.testing.assert_allclose(np.asarray(logits_single), np.asarray(ref_single),
                               rtol=1e-4, atol=1e-5)

    print("KERNEL_OK")
</pallas_src>

<mosaic_0001>
module attributes {stable_mosaic.version = 11 : i64} {
  func.func @skill_actor_kernel(%arg0: memref<64x24xf32, #tpu.memory_space<vmem>>, %arg1: memref<8x32xf32, #tpu.memory_space<vmem>>, %arg2: memref<152x96xf32, #tpu.memory_space<vmem>>, %arg3: memref<8x96xf32, #tpu.memory_space<vmem>>, %arg4: memref<8x48xf32, #tpu.memory_space<vmem>>) attributes {dimension_semantics = [], scalar_prefetch = 0 : i64, scratch_operands = 0 : i64, tpu.core_type = #tpu.core_type<tc>} {
    %c0 = arith.constant 0 : index
    %c0_0 = arith.constant 0 : index
    %0 = vector.load %arg2[%c0, %c0_0] : memref<152x96xf32, #tpu.memory_space<vmem>>, vector<24x32xf32>
    %c24 = arith.constant 24 : index
    %c0_1 = arith.constant 0 : index
    %1 = vector.load %arg2[%c24, %c0_1] : memref<152x96xf32, #tpu.memory_space<vmem>>, vector<32x96xf32>
    %c56 = arith.constant 56 : index
    %c0_2 = arith.constant 0 : index
    %2 = vector.load %arg2[%c56, %c0_2] : memref<152x96xf32, #tpu.memory_space<vmem>>, vector<32x96xf32>
    %c88 = arith.constant 88 : index
    %c0_3 = arith.constant 0 : index
    %3 = vector.load %arg2[%c88, %c0_3] : memref<152x96xf32, #tpu.memory_space<vmem>>, vector<32x32xf32>
    %c120 = arith.constant 120 : index
    %c0_4 = arith.constant 0 : index
    %4 = vector.load %arg2[%c120, %c0_4] : memref<152x96xf32, #tpu.memory_space<vmem>>, vector<32x16xf32>
    %c0_5 = arith.constant 0 : index
    %c0_6 = arith.constant 0 : index
    %5 = vector.load %arg3[%c0_5, %c0_6] : memref<8x96xf32, #tpu.memory_space<vmem>>, vector<1x32xf32>
    %c1 = arith.constant 1 : index
    %c0_7 = arith.constant 0 : index
    %6 = vector.load %arg3[%c1, %c0_7] : memref<8x96xf32, #tpu.memory_space<vmem>>, vector<1x32xf32>
    %c2 = arith.constant 2 : index
    %c0_8 = arith.constant 0 : index
    %7 = vector.load %arg3[%c2, %c0_8] : memref<8x96xf32, #tpu.memory_space<vmem>>, vector<1x32xf32>
    %c3 = arith.constant 3 : index
    %c0_9 = arith.constant 0 : index
    %8 = vector.load %arg3[%c3, %c0_9] : memref<8x96xf32, #tpu.memory_space<vmem>>, vector<1x96xf32>
    %c4 = arith.constant 4 : index
    %c0_10 = arith.constant 0 : index
    %9 = vector.load %arg3[%c4, %c0_10] : memref<8x96xf32, #tpu.memory_space<vmem>>, vector<1x32xf32>
    %c5 = arith.constant 5 : index
    %c0_11 = arith.constant 0 : index
    %10 = vector.load %arg3[%c5, %c0_11] : memref<8x96xf32, #tpu.memory_space<vmem>>, vector<1x32xf32>
    %c6 = arith.constant 6 : index
    %c0_12 = arith.constant 0 : index
    %11 = vector.load %arg3[%c6, %c0_12] : memref<8x96xf32, #tpu.memory_space<vmem>>, vector<1x16xf32>
    %c0_13 = arith.constant 0 : index
    %c0_14 = arith.constant 0 : index
    %12 = vector.load %arg0[%c0_13, %c0_14] : memref<64x24xf32, #tpu.memory_space<vmem>>, vector<64x24xf32>
    %cst = arith.constant dense<0.000000e+00> : vector<64x32xf32>
    %13 = tpu.matmul %12, %0, %cst {dimension_numbers = #tpu.dot_dimension_numbers<[1], [0], [0], [1], [0, 0, 1, 1], [], []>} : vector<64x24xf32>, vector<24x32xf32>, vector<64x32xf32> -> vector<64x32xf32>
    %14 = vector.broadcast %5 : vector<1x32xf32> to vector<64x32xf32>
    %15 = arith.addf %13, %14 : vector<64x32xf32>
    %cst_15 = arith.constant dense<0.000000e+00> : vector<64xf32>
    %16 = vector.multi_reduction <add>, %15, %cst_15 [1] : vector<64x32xf32> to vector<64xf32>
    %17 = vector.shape_cast %16 : vector<64xf32> to vector<64x1xf32>
    %cst_16 = arith.constant 3.200000e+01 : f32
    %18 = vector.broadcast %cst_16 : f32 to vector<64x1xf32>
    %19 = arith.divf %17, %18 : vector<64x1xf32>
    %20 = vector.broadcast %19 : vector<64x1xf32> to vector<64x32xf32>
    %21 = arith.subf %15, %20 : vector<64x32xf32>
    %22 = arith.mulf %21, %21 : vector<64x32xf32>
    %cst_17 = arith.constant dense<0.000000e+00> : vector<64xf32>
    %23 = vector.multi_reduction <add>, %22, %cst_17 [1] : vector<64x32xf32> to vector<64xf32>
    %24 = vector.shape_cast %23 : vector<64xf32> to vector<64x1xf32>
    %cst_18 = arith.constant 3.200000e+01 : f32
    %25 = vector.broadcast %cst_18 : f32 to vector<64x1xf32>
    %26 = arith.divf %24, %25 : vector<64x1xf32>
    %27 = vector.broadcast %19 : vector<64x1xf32> to vector<64x32xf32>
    %28 = arith.subf %15, %27 : vector<64x32xf32>
    %cst_19 = arith.constant 9.99999974E-6 : f32
    %29 = vector.broadcast %cst_19 : f32 to vector<64x1xf32>
    %30 = arith.addf %26, %29 : vector<64x1xf32>
    %31 = math.rsqrt %30 : vector<64x1xf32>
    %32 = vector.broadcast %31 : vector<64x1xf32> to vector<64x32xf32>
    %33 = arith.mulf %28, %32 : vector<64x32xf32>
    %34 = vector.broadcast %6 : vector<1x32xf32> to vector<64x32xf32>
    %35 = arith.mulf %33, %34 : vector<64x32xf32>
    %36 = vector.broadcast %7 : vector<1x32xf32> to vector<64x32xf32>
    %37 = arith.addf %35, %36 : vector<64x32xf32>
    %38 = math.tanh %37 : vector<64x32xf32>
    %cst_20 = arith.constant dense<0.000000e+00> : vector<64x96xf32>
    %39 = tpu.matmul %38, %1, %cst_20 {dimension_numbers = #tpu.dot_dimension_numbers<[1], [0], [0], [1], [0, 0, 1, 1], [], []>} : vector<64x32xf32>, vector<32x96xf32>, vector<64x96xf32> -> vector<64x96xf32>
    %40 = vector.broadcast %8 : vector<1x96xf32> to vector<64x96xf32>
    %41 = arith.addf %39, %40 : vector<64x96xf32>
    %c0_21 = arith.constant 0 : index
    %c0_22 = arith.constant 0 : index
    %42 = vector.load %arg1[%c0_21, %c0_22] : memref<8x32xf32, #tpu.memory_space<vmem>>, vector<8x32xf32>
    %43 = vector.extract_strided_slice %41 {offsets = [0, 0], sizes = [8, 96], strides = [1, 1]} : vector<64x96xf32> to vector<8x96xf32>
    %cst_23 = arith.constant dense<0.000000e+00> : vector<8x96xf32>
    %44 = tpu.matmul %42, %2, %cst_23 {dimension_numbers = #tpu.dot_dimension_numbers<[1], [0], [0], [1], [0, 0, 1, 1], [], []>} : vector<8x32xf32>, vector<32x96xf32>, vector<8x96xf32> -> vector<8x96xf32>
    %45 = vector.extract_strided_slice %43 {offsets = [0, 0], sizes = [8, 32], strides = [1, 1]} : vector<8x96xf32> to vector<8x32xf32>
    %46 = vector.extract_strided_slice %44 {offsets = [0, 0], sizes = [8, 32], strides = [1, 1]} : vector<8x96xf32> to vector<8x32xf32>
    %47 = arith.addf %45, %46 : vector<8x32xf32>
    %48 = arith.negf %47 : vector<8x32xf32>
    %49 = math.exp %48 : vector<8x32xf32>
    %cst_24 = arith.constant 1.000000e+00 : f32
    %50 = vector.broadcast %cst_24 : f32 to vector<8x32xf32>
    %51 = arith.addf %50, %49 : vector<8x32xf32>
    %52 = arith.divf %50, %51 : vector<8x32xf32>
    %53 = vector.extract_strided_slice %43 {offsets = [0, 32], sizes = [8, 32], strides = [1, 1]} : vector<8x96xf32> to vector<8x32xf32>
    %54 = vector.extract_strided_slice %44 {offsets = [0, 32], sizes = [8, 32], strides = [1, 1]} : vector<8x96xf32> to vector<8x32xf32>
    %55 = arith.addf %53, %54 : vector<8x32xf32>
    %56 = arith.negf %55 : vector<8x32xf32>
    %57 = math.exp %56 : vector<8x32xf32>
    %cst_25 = arith.constant 1.000000e+00 : f32
    %58 = vector.broadcast %cst_25 : f32 to vector<8x32xf32>
    %59 = arith.addf %58, %57 : vector<8x32xf32>
    %60 = arith.divf %58, %59 : vector<8x32xf32>
    %61 = vector.extract_strided_slice %43 {offsets = [0, 64], sizes = [8, 32], strides = [1, 1]} : vector<8x96xf32> to vector<8x32xf32>
    %62 = vector.extract_strided_slice %44 {offsets = [0, 64], sizes = [8, 32], strides = [1, 1]} : vector<8x96xf32> to vector<8x32xf32>
    %63 = vector.broadcast %9 : vector<1x32xf32> to vector<8x32xf32>
    %64 = arith.addf %62, %63 : vector<8x32xf32>
    %65 = arith.mulf %52, %64 : vector<8x32xf32>
    %66 = arith.addf %61, %65 : vector<8x32xf32>
    %67 = math.tanh %66 : vector<8x32xf32>
    %cst_26 = arith.constant 1.000000e+00 : f32
    %68 = vector.broadcast %cst_26 : f32 to vector<8x32xf32>
    %69 = arith.subf %68, %60 : vector<8x32xf32>
    %70 = arith.mulf %69, %67 : vector<8x32xf32>
    %71 = arith.mulf %60, %42 : vector<8x32xf32>
    %72 = arith.addf %70, %71 : vector<8x32xf32>
    %73 = vector.extract_strided_slice %41 {offsets = [8, 0], sizes = [8, 96], strides = [1, 1]} : vector<64x96xf32> to vector<8x96xf32>
    %cst_27 = arith.constant dense<0.000000e+00> : vector<8x96xf32>
    %74 = tpu.matmul %72, %2, %cst_27 {dimension_numbers = #tpu.dot_dimension_numbers<[1], [0], [0], [1], [0, 0, 1, 1], [], []>} : vector<8x32xf32>, vector<32x96xf32>, vector<8x96xf32> -> vector<8x96xf32>
    %75 = vector.extract_strided_slice %73 {offsets = [0, 0], sizes = [8, 32], strides = [1, 1]} : vector<8x96xf32> to vector<8x32xf32>
    %76 = vector.extract_strided_slice %74 {offsets = [0, 0], sizes = [8, 32], strides = [1, 1]} : vector<8x96xf32> to vector<8x32xf32>
    %77 = arith.addf %75, %76 : vector<8x32xf32>
    %78 = arith.negf %77 : vector<8x32xf32>
    %79 = math.exp %78 : vector<8x32xf32>
    %cst_28 = arith.constant 1.000000e+00 : f32
    %80 = vector.broadcast %cst_28 : f32 to vector<8x32xf32>
    %81 = arith.addf %80, %79 : vector<8x32xf32>
    %82 = arith.divf %80, %81 : vector<8x32xf32>
    %83 = vector.extract_strided_slice %73 {offsets = [0, 32], sizes = [8, 32], strides = [1, 1]} : vector<8x96xf32> to vector<8x32xf32>
    %84 = vector.extract_strided_slice %74 {offsets = [0, 32], sizes = [8, 32], strides = [1, 1]} : vector<8x96xf32> to vector<8x32xf32>
    %85 = arith.addf %83, %84 : vector<8x32xf32>
    %86 = arith.negf %85 : vector<8x32xf32>
    %87 = math.exp %86 : vector<8x32xf32>
    %cst_29 = arith.constant 1.000000e+00 : f32
    %88 = vector.broadcast %cst_29 : f32 to vector<8x32xf32>
    %89 = arith.addf %88, %87 : vector<8x32xf32>
    %90 = arith.divf %88, %89 : vector<8x32xf32>
    %91 = vector.extract_strided_slice %73 {offsets = [0, 64], sizes = [8, 32], strides = [1, 1]} : vector<8x96xf32> to vector<8x32xf32>
    %92 = vector.extract_strided_slice %74 {offsets = [0, 64], sizes = [8, 32], strides = [1, 1]} : vector<8x96xf32> to vector<8x32xf32>
    %93 = vector.broadcast %9 : vector<1x32xf32> to vector<8x32xf32>
    %94 = arith.addf %92, %93 : vector<8x32xf32>
    %95 = arith.mulf %82, %94 : vector<8x32xf32>
    %96 = arith.addf %91, %95 : vector<8x32xf32>
    %97 = math.tanh %96 : vector<8x32xf32>
    %cst_30 = arith.constant 1.000000e+00 : f32
    %98 = vector.broadcast %cst_30 : f32 to vector<8x32xf32>
    %99 = arith.subf %98, %90 : vector<8x32xf32>
    %100 = arith.mulf %99, %97 : vector<8x32xf32>
    %101 = arith.mulf %90, %72 : vector<8x32xf32>
    %102 = arith.addf %100, %101 : vector<8x32xf32>
    %103 = vector.extract_strided_slice %41 {offsets = [16, 0], sizes = [8, 96], strides = [1, 1]} : vector<64x96xf32> to vector<8x96xf32>
    %cst_31 = arith.constant dense<0.000000e+00> : vector<8x96xf32>
    %104 = tpu.matmul %102, %2, %cst_31 {dimension_numbers = #tpu.dot_dimension_numbers<[1], [0], [0], [1], [0, 0, 1, 1], [], []>} : vector<8x32xf32>, vector<32x96xf32>, vector<8x96xf32> -> vector<8x96xf32>
    %105 = vector.extract_strided_slice %103 {offsets = [0, 0], sizes = [8, 32], strides = [1, 1]} : vector<8x96xf32> to vector<8x32xf32>
    %106 = vector.extract_strided_slice %104 {offsets = [0, 0], sizes = [8, 32], strides = [1, 1]} : vector<8x96xf32> to vector<8x32xf32>
    %107 = arith.addf %105, %106 : vector<8x32xf32>
    %108 = arith.negf %107 : vector<8x32xf32>
    %109 = math.exp %108 : vector<8x32xf32>
    %cst_32 = arith.constant 1.000000e+00 : f32
    %110 = vector.broadcast %cst_32 : f32 to vector<8x32xf32>
    %111 = arith.addf %110, %109 : vector<8x32xf32>
    %112 = arith.divf %110, %111 : vector<8x32xf32>
    %113 = vector.extract_strided_slice %103 {offsets = [0, 32], sizes = [8, 32], strides = [1, 1]} : vector<8x96xf32> to vector<8x32xf32>
    %114 = vector.extract_strided_slice %104 {offsets = [0, 32], sizes = [8, 32], strides = [1, 1]} : vector<8x96xf32> to vector<8x32xf32>
    %115 = arith.addf %113, %114 : vector<8x32xf32>
    %116 = arith.negf %115 : vector<8x32xf32>
    %117 = math.exp %116 : vector<8x32xf32>
    %cst_33 = arith.constant 1.000000e+00 : f32
    %118 = vector.broadcast %cst_33 : f32 to vector<8x32xf32>
    %119 = arith.addf %118, %117 : vector<8x32xf32>
    %120 = arith.divf %118, %119 : vector<8x32xf32>
    %121 = vector.extract_strided_slice %103 {offsets = [0, 64], sizes = [8, 32], strides = [1, 1]} : vector<8x96xf32> to vector<8x32xf32>
    %122 = vector.extract_strided_slice %104 {offsets = [0, 64], sizes = [8, 32], strides = [1, 1]} : vector<8x96xf32> to vector<8x32xf32>
    %123 = vector.broadcast %9 : vector<1x32xf32> to vector<8x32xf32>
    %124 = arith.addf %122, %123 : vector<8x32xf32>
    %125 = arith.mulf %112, %124 : vector<8x32xf32>
    %126 = arith.addf %121, %125 : vector<8x32xf32>
    %127 = math.tanh %126 : vector<8x32xf32>
    %cst_34 = arith.constant 1.000000e+00 : f32
    %128 = vector.broadcast %cst_34 : f32 to vector<8x32xf32>
    %129 = arith.subf %128, %120 : vector<8x32xf32>
    %130 = arith.mulf %129, %127 : vector<8x32xf32>
    %131 = arith.mulf %120, %102 : vector<8x32xf32>
    %132 = arith.addf %130, %131 : vector<8x32xf32>
    %133 = vector.extract_strided_slice %41 {offsets = [24, 0], sizes = [8, 96], strides = [1, 1]} : vector<64x96xf32> to vector<8x96xf32>
    %cst_35 = arith.constant dense<0.000000e+00> : vector<8x96xf32>
    %134 = tpu.matmul %132, %2, %cst_35 {dimension_numbers = #tpu.dot_dimension_numbers<[1], [0], [0], [1], [0, 0, 1, 1], [], []>} : vector<8x32xf32>, vector<32x96xf32>, vector<8x96xf32> -> vector<8x96xf32>
    %135 = vector.extract_strided_slice %133 {offsets = [0, 0], sizes = [8, 32], strides = [1, 1]} : vector<8x96xf32> to vector<8x32xf32>
    %136 = vector.extract_strided_slice %134 {offsets = [0, 0], sizes = [8, 32], strides = [1, 1]} : vector<8x96xf32> to vector<8x32xf32>
    %137 = arith.addf %135, %136 : vector<8x32xf32>
    %138 = arith.negf %137 : vector<8x32xf32>
    %139 = math.exp %138 : vector<8x32xf32>
    %cst_36 = arith.constant 1.000000e+00 : f32
    %140 = vector.broadcast %cst_36 : f32 to vector<8x32xf32>
    %141 = arith.addf %140, %139 : vector<8x32xf32>
    %142 = arith.divf %140, %141 : vector<8x32xf32>
    %143 = vector.extract_strided_slice %133 {offsets = [0, 32], sizes = [8, 32], strides = [1, 1]} : vector<8x96xf32> to vector<8x32xf32>
    %144 = vector.extract_strided_slice %134 {offsets = [0, 32], sizes = [8, 32], strides = [1, 1]} : vector<8x96xf32> to vector<8x32xf32>
    %145 = arith.addf %143, %144 : vector<8x32xf32>
    %146 = arith.negf %145 : vector<8x32xf32>
    %147 = math.exp %146 : vector<8x32xf32>
    %cst_37 = arith.constant 1.000000e+00 : f32
    %148 = vector.broadcast %cst_37 : f32 to vector<8x32xf32>
    %149 = arith.addf %148, %147 : vector<8x32xf32>
    %150 = arith.divf %148, %149 : vector<8x32xf32>
    %151 = vector.extract_strided_slice %133 {offsets = [0, 64], sizes = [8, 32], strides = [1, 1]} : vector<8x96xf32> to vector<8x32xf32>
    %152 = vector.extract_strided_slice %134 {offsets = [0, 64], sizes = [8, 32], strides = [1, 1]} : vector<8x96xf32> to vector<8x32xf32>
    %153 = vector.broadcast %9 : vector<1x32xf32> to vector<8x32xf32>
    %154 = arith.addf %152, %153 : vector<8x32xf32>
    %155 = arith.mulf %142, %154 : vector<8x32xf32>
    %156 = arith.addf %151, %155 : vector<8x32xf32>
    %157 = math.tanh %156 : vector<8x32xf32>
    %cst_38 = arith.constant 1.000000e+00 : f32
    %158 = vector.broadcast %cst_38 : f32 to vector<8x32xf32>
    %159 = arith.subf %158, %150 : vector<8x32xf32>
    %160 = arith.mulf %159, %157 : vector<8x32xf32>
    %161 = arith.mulf %150, %132 : vector<8x32xf32>
    %162 = arith.addf %160, %161 : vector<8x32xf32>
    %163 = vector.extract_strided_slice %41 {offsets = [32, 0], sizes = [8, 96], strides = [1, 1]} : vector<64x96xf32> to vector<8x96xf32>
    %cst_39 = arith.constant dense<0.000000e+00> : vector<8x96xf32>
    %164 = tpu.matmul %162, %2, %cst_39 {dimension_numbers = #tpu.dot_dimension_numbers<[1], [0], [0], [1], [0, 0, 1, 1], [], []>} : vector<8x32xf32>, vector<32x96xf32>, vector<8x96xf32> -> vector<8x96xf32>
    %165 = vector.extract_strided_slice %163 {offsets = [0, 0], sizes = [8, 32], strides = [1, 1]} : vector<8x96xf32> to vector<8x32xf32>
    %166 = vector.extract_strided_slice %164 {offsets = [0, 0], sizes = [8, 32], strides = [1, 1]} : vector<8x96xf32> to vector<8x32xf32>
    %167 = arith.addf %165, %166 : vector<8x32xf32>
    %168 = arith.negf %167 : vector<8x32xf32>
    %169 = math.exp %168 : vector<8x32xf32>
    %cst_40 = arith.constant 1.000000e+00 : f32
    %170 = vector.broadcast %cst_40 : f32 to vector<8x32xf32>
    %171 = arith.addf %170, %169 : vector<8x32xf32>
    %172 = arith.divf %170, %171 : vector<8x32xf32>
    %173 = vector.extract_strided_slice %163 {offsets = [0, 32], sizes = [8, 32], strides = [1, 1]} : vector<8x96xf32> to vector<8x32xf32>
    %174 = vector.extract_strided_slice %164 {offsets = [0, 32], sizes = [8, 32], strides = [1, 1]} : vector<8x96xf32> to vector<8x32xf32>
    %175 = arith.addf %173, %174 : vector<8x32xf32>
    %176 = arith.negf %175 : vector<8x32xf32>
    %177 = math.exp %176 : vector<8x32xf32>
    %cst_41 = arith.constant 1.000000e+00 : f32
    %178 = vector.broadcast %cst_41 : f32 to vector<8x32xf32>
    %179 = arith.addf %178, %177 : vector<8x32xf32>
    %180 = arith.divf %178, %179 : vector<8x32xf32>
    %181 = vector.extract_strided_slice %163 {offsets = [0, 64], sizes = [8, 32], strides = [1, 1]} : vector<8x96xf32> to vector<8x32xf32>
    %182 = vector.extract_strided_slice %164 {offsets = [0, 64], sizes = [8, 32], strides = [1, 1]} : vector<8x96xf32> to vector<8x32xf32>
    %183 = vector.broadcast %9 : vector<1x32xf32> to vector<8x32xf32>
    %184 = arith.addf %182, %183 : vector<8x32xf32>
    %185 = arith.mulf %172, %184 : vector<8x32xf32>
    %186 = arith.addf %181, %185 : vector<8x32xf32>
    %187 = math.tanh %186 : vector<8x32xf32>
    %cst_42 = arith.constant 1.000000e+00 : f32
    %188 = vector.broadcast %cst_42 : f32 to vector<8x32xf32>
    %189 = arith.subf %188, %180 : vector<8x32xf32>
    %190 = arith.mulf %189, %187 : vector<8x32xf32>
    %191 = arith.mulf %180, %162 : vector<8x32xf32>
    %192 = arith.addf %190, %191 : vector<8x32xf32>
    %193 = vector.extract_strided_slice %41 {offsets = [40, 0], sizes = [8, 96], strides = [1, 1]} : vector<64x96xf32> to vector<8x96xf32>
    %cst_43 = arith.constant dense<0.000000e+00> : vector<8x96xf32>
    %194 = tpu.matmul %192, %2, %cst_43 {dimension_numbers = #tpu.dot_dimension_numbers<[1], [0], [0], [1], [0, 0, 1, 1], [], []>} : vector<8x32xf32>, vector<32x96xf32>, vector<8x96xf32> -> vector<8x96xf32>
    %195 = vector.extract_strided_slice %193 {offsets = [0, 0], sizes = [8, 32], strides = [1, 1]} : vector<8x96xf32> to vector<8x32xf32>
    %196 = vector.extract_strided_slice %194 {offsets = [0, 0], sizes = [8, 32], strides = [1, 1]} : vector<8x96xf32> to vector<8x32xf32>
    %197 = arith.addf %195, %196 : vector<8x32xf32>
    %198 = arith.negf %197 : vector<8x32xf32>
    %199 = math.exp %198 : vector<8x32xf32>
    %cst_44 = arith.constant 1.000000e+00 : f32
    %200 = vector.broadcast %cst_44 : f32 to vector<8x32xf32>
    %201 = arith.addf %200, %199 : vector<8x32xf32>
    %202 = arith.divf %200, %201 : vector<8x32xf32>
    %203 = vector.extract_strided_slice %193 {offsets = [0, 32], sizes = [8, 32], strides = [1, 1]} : vector<8x96xf32> to vector<8x32xf32>
    %204 = vector.extract_strided_slice %194 {offsets = [0, 32], sizes = [8, 32], strides = [1, 1]} : vector<8x96xf32> to vector<8x32xf32>
    %205 = arith.addf %203, %204 : vector<8x32xf32>
    %206 = arith.negf %205 : vector<8x32xf32>
    %207 = math.exp %206 : vector<8x32xf32>
    %cst_45 = arith.constant 1.000000e+00 : f32
    %208 = vector.broadcast %cst_45 : f32 to vector<8x32xf32>
    %209 = arith.addf %208, %207 : vector<8x32xf32>
    %210 = arith.divf %208, %209 : vector<8x32xf32>
    %211 = vector.extract_strided_slice %193 {offsets = [0, 64], sizes = [8, 32], strides = [1, 1]} : vector<8x96xf32> to vector<8x32xf32>
    %212 = vector.extract_strided_slice %194 {offsets = [0, 64], sizes = [8, 32], strides = [1, 1]} : vector<8x96xf32> to vector<8x32xf32>
    %213 = vector.broadcast %9 : vector<1x32xf32> to vector<8x32xf32>
    %214 = arith.addf %212, %213 : vector<8x32xf32>
    %215 = arith.mulf %202, %214 : vector<8x32xf32>
    %216 = arith.addf %211, %215 : vector<8x32xf32>
    %217 = math.tanh %216 : vector<8x32xf32>
    %cst_46 = arith.constant 1.000000e+00 : f32
    %218 = vector.broadcast %cst_46 : f32 to vector<8x32xf32>
    %219 = arith.subf %218, %210 : vector<8x32xf32>
    %220 = arith.mulf %219, %217 : vector<8x32xf32>
    %221 = arith.mulf %210, %192 : vector<8x32xf32>
    %222 = arith.addf %220, %221 : vector<8x32xf32>
    %223 = vector.extract_strided_slice %41 {offsets = [48, 0], sizes = [8, 96], strides = [1, 1]} : vector<64x96xf32> to vector<8x96xf32>
    %cst_47 = arith.constant dense<0.000000e+00> : vector<8x96xf32>
    %224 = tpu.matmul %222, %2, %cst_47 {dimension_numbers = #tpu.dot_dimension_numbers<[1], [0], [0], [1], [0, 0, 1, 1], [], []>} : vector<8x32xf32>, vector<32x96xf32>, vector<8x96xf32> -> vector<8x96xf32>
    %225 = vector.extract_strided_slice %223 {offsets = [0, 0], sizes = [8, 32], strides = [1, 1]} : vector<8x96xf32> to vector<8x32xf32>
    %226 = vector.extract_strided_slice %224 {offsets = [0, 0], sizes = [8, 32], strides = [1, 1]} : vector<8x96xf32> to vector<8x32xf32>
    %227 = arith.addf %225, %226 : vector<8x32xf32>
    %228 = arith.negf %227 : vector<8x32xf32>
    %229 = math.exp %228 : vector<8x32xf32>
    %cst_48 = arith.constant 1.000000e+00 : f32
    %230 = vector.broadcast %cst_48 : f32 to vector<8x32xf32>
    %231 = arith.addf %230, %229 : vector<8x32xf32>
    %232 = arith.divf %230, %231 : vector<8x32xf32>
    %233 = vector.extract_strided_slice %223 {offsets = [0, 32], sizes = [8, 32], strides = [1, 1]} : vector<8x96xf32> to vector<8x32xf32>
    %234 = vector.extract_strided_slice %224 {offsets = [0, 32], sizes = [8, 32], strides = [1, 1]} : vector<8x96xf32> to vector<8x32xf32>
    %235 = arith.addf %233, %234 : vector<8x32xf32>
    %236 = arith.negf %235 : vector<8x32xf32>
    %237 = math.exp %236 : vector<8x32xf32>
    %cst_49 = arith.constant 1.000000e+00 : f32
    %238 = vector.broadcast %cst_49 : f32 to vector<8x32xf32>
    %239 = arith.addf %238, %237 : vector<8x32xf32>
    %240 = arith.divf %238, %239 : vector<8x32xf32>
    %241 = vector.extract_strided_slice %223 {offsets = [0, 64], sizes = [8, 32], strides = [1, 1]} : vector<8x96xf32> to vector<8x32xf32>
    %242 = vector.extract_strided_slice %224 {offsets = [0, 64], sizes = [8, 32], strides = [1, 1]} : vector<8x96xf32> to vector<8x32xf32>
    %243 = vector.broadcast %9 : vector<1x32xf32> to vector<8x32xf32>
    %244 = arith.addf %242, %243 : vector<8x32xf32>
    %245 = arith.mulf %232, %244 : vector<8x32xf32>
    %246 = arith.addf %241, %245 : vector<8x32xf32>
    %247 = math.tanh %246 : vector<8x32xf32>
    %cst_50 = arith.constant 1.000000e+00 : f32
    %248 = vector.broadcast %cst_50 : f32 to vector<8x32xf32>
    %249 = arith.subf %248, %240 : vector<8x32xf32>
    %250 = arith.mulf %249, %247 : vector<8x32xf32>
    %251 = arith.mulf %240, %222 : vector<8x32xf32>
    %252 = arith.addf %250, %251 : vector<8x32xf32>
    %253 = vector.extract_strided_slice %41 {offsets = [56, 0], sizes = [8, 96], strides = [1, 1]} : vector<64x96xf32> to vector<8x96xf32>
    %cst_51 = arith.constant dense<0.000000e+00> : vector<8x96xf32>
    %254 = tpu.matmul %252, %2, %cst_51 {dimension_numbers = #tpu.dot_dimension_numbers<[1], [0], [0], [1], [0, 0, 1, 1], [], []>} : vector<8x32xf32>, vector<32x96xf32>, vector<8x96xf32> -> vector<8x96xf32>
    %255 = vector.extract_strided_slice %253 {offsets = [0, 0], sizes = [8, 32], strides = [1, 1]} : vector<8x96xf32> to vector<8x32xf32>
    %256 = vector.extract_strided_slice %254 {offsets = [0, 0], sizes = [8, 32], strides = [1, 1]} : vector<8x96xf32> to vector<8x32xf32>
    %257 = arith.addf %255, %256 : vector<8x32xf32>
    %258 = arith.negf %257 : vector<8x32xf32>
    %259 = math.exp %258 : vector<8x32xf32>
    %cst_52 = arith.constant 1.000000e+00 : f32
    %260 = vector.broadcast %cst_52 : f32 to vector<8x32xf32>
    %261 = arith.addf %260, %259 : vector<8x32xf32>
    %262 = arith.divf %260, %261 : vector<8x32xf32>
    %263 = vector.extract_strided_slice %253 {offsets = [0, 32], sizes = [8, 32], strides = [1, 1]} : vector<8x96xf32> to vector<8x32xf32>
    %264 = vector.extract_strided_slice %254 {offsets = [0, 32], sizes = [8, 32], strides = [1, 1]} : vector<8x96xf32> to vector<8x32xf32>
    %265 = arith.addf %263, %264 : vector<8x32xf32>
    %266 = arith.negf %265 : vector<8x32xf32>
    %267 = math.exp %266 : vector<8x32xf32>
    %cst_53 = arith.constant 1.000000e+00 : f32
    %268 = vector.broadcast %cst_53 : f32 to vector<8x32xf32>
    %269 = arith.addf %268, %267 : vector<8x32xf32>
    %270 = arith.divf %268, %269 : vector<8x32xf32>
    %271 = vector.extract_strided_slice %253 {offsets = [0, 64], sizes = [8, 32], strides = [1, 1]} : vector<8x96xf32> to vector<8x32xf32>
    %272 = vector.extract_strided_slice %254 {offsets = [0, 64], sizes = [8, 32], strides = [1, 1]} : vector<8x96xf32> to vector<8x32xf32>
    %273 = vector.broadcast %9 : vector<1x32xf32> to vector<8x32xf32>
    %274 = arith.addf %272, %273 : vector<8x32xf32>
    %275 = arith.mulf %262, %274 : vector<8x32xf32>
    %276 = arith.addf %271, %275 : vector<8x32xf32>
    %277 = math.tanh %276 : vector<8x32xf32>
    %cst_54 = arith.constant 1.000000e+00 : f32
    %278 = vector.broadcast %cst_54 : f32 to vector<8x32xf32>
    %279 = arith.subf %278, %270 : vector<8x32xf32>
    %280 = arith.mulf %279, %277 : vector<8x32xf32>
    %281 = arith.mulf %270, %252 : vector<8x32xf32>
    %282 = arith.addf %280, %281 : vector<8x32xf32>
    %cst_55 = arith.constant dense<0.000000e+00> : vector<8x32xf32>
    %283 = tpu.matmul %282, %3, %cst_55 {dimension_numbers = #tpu.dot_dimension_numbers<[1], [0], [0], [1], [0, 0, 1, 1], [], []>} : vector<8x32xf32>, vector<32x32xf32>, vector<8x32xf32> -> vector<8x32xf32>
    %284 = vector.broadcast %10 : vector<1x32xf32> to vector<8x32xf32>
    %285 = arith.addf %283, %284 : vector<8x32xf32>
    %cst_56 = arith.constant 0.000000e+00 : f32
    %286 = vector.broadcast %cst_56 : f32 to vector<8x32xf32>
    %287 = arith.maximumf %285, %286 : vector<8x32xf32>
    %cst_57 = arith.constant dense<0.000000e+00> : vector<8x16xf32>
    %288 = tpu.matmul %287, %4, %cst_57 {dimension_numbers = #tpu.dot_dimension_numbers<[1], [0], [0], [1], [0, 0, 1, 1], [], []>} : vector<8x32xf32>, vector<32x16xf32>, vector<8x16xf32> -> vector<8x16xf32>
    %289 = vector.broadcast %11 : vector<1x16xf32> to vector<8x16xf32>
    %290 = arith.addf %288, %289 : vector<8x16xf32>
    %291 = tpu.concatenate %290, %282 in 1 : vector<8x16xf32>, vector<8x32xf32> -> vector<8x48xf32>
    %c0_58 = arith.constant 0 : index
    %c0_59 = arith.constant 0 : index
    %292 = vector.load %arg4[%c0_58, %c0_59] : memref<8x48xf32, #tpu.memory_space<vmem>>, vector<8x48xf32>
    tpu.vector_store %arg4[%c0_58, %c0_59], %291 {strides = array<i32>} : memref<8x48xf32, #tpu.memory_space<vmem>>, vector<8x48xf32>,
    return
  }
}

</mosaic_0001>

<llo_original>
// kernel: fused_forward.1
$region0: #{fused_forward.1}
  #allocation0 [shape = 'u32[]', space=smem, size = 0x4, offset = 0x4, fixed_abs, tag = 'smem constant byte address 0x4 - core index']
  #allocation1 [shape = 'u32[144,128]{1,0:T(1,128)}', space=vmem, size = 0x12000, scoped, tag = 'internal scratch']
  %s0 = inlined_call_operand.vmem [shape: f32[64,24], index: 0, kind: input, shape index: {}]
  %s1 = inlined_call_operand.vmem [shape: f32[8,32], index: 1, kind: input, shape index: {}]
  %s2 = inlined_call_operand.hbm [shape: f32[152,96], index: 2, kind: input, shape index: {}]
  %s3 = inlined_call_operand.vmem [shape: f32[8,96], index: 3, kind: input, shape index: {}]
  %s4 = inlined_call_operand.hbm [shape: f32[8,48], index: 4, kind: output, shape index: {}]
  %s5 = sld [smem:[#allocation0]]
  $region30: #{fused_forward.1} parent=0
    _
  %s7 = ssub.s32 1, %s5
  %s8 = scalar_select 0, %s7, %s5
  $region1: #{fused_forward.1} parent=0
    #allocation2 [shape = 'u8[77824]{0}', space=vmem, size = 0x13000, scoped, tag = 'input window, operand 2, single buffered']
    #allocation3 [shape = 's32[1]{0}', space=sflag, size = 0x4, scoped, tag = 'scoped memory for fused_forward.1']
    #allocation4 [shape = 's32[1]{0}', space=sflag, size = 0x4, scoped, tag = 'scoped memory for fused_forward.1']
    #allocation5 [shape = 'u8[4096]{0}', space=vmem, size = 0x1000, scoped, tag = 'output window, operand 0, single buffered']
    %9 = vsyncpa [#allocation3], 0
    %10 = vsyncpa [#allocation4], 0
    // Predicated region
    $region2: #{fused_forward.1} parent=1 // pred_check
      _
    $region3: #{fused_forward.1} parent=1 // pred_check_branch
      %12 = sbr.rel (0) target = $region5
    $region4: #{fused_forward.1} parent=1 // pred_region
      _
    $region5: #{fused_forward.1} parent=1 // pred_fallthru
      _
    // Predicated region
    $region6: #{fused_forward.1} parent=1 // pred_check
      _
    $region7: #{fused_forward.1} parent=1 // pred_check_branch
      %14 = sbr.rel (0) target = $region9
    $region8: #{fused_forward.1} parent=1 // pred_region
      _
    $region9: #{fused_forward.1} parent=1 // pred_fallthru
      _
    // Predicated region
    $region10: #{fused_forward.1} parent=1 // pred_check
      _
    $region11: #{fused_forward.1} parent=1 // pred_check_branch
      %16 = sbr.rel (0) target = $region13
    $region12: #{fused_forward.1} parent=1 // pred_region
      %s18 = ssub.s32 2432, 2432
      %19 = vsyncadd [#allocation3], %s18
      %s20 = sshll.u32 [#allocation2], 4
      %s21 = int_to_ptr.vmem [resolvable:$true] %s20
      %26 = dma.hbm_to_vmem [thread:$0]  %s2, 2432, %s21, [#allocation3], 128, 128, 8
    $region13: #{fused_forward.1} parent=1 // pred_fallthru
      _
    // Predicated region
    $region14: #{fused_forward.1} parent=1 // pred_check
      _
    $region15: #{fused_forward.1} parent=1 // pred_check_branch
      %28 = sbr.rel (0) target = $region17
    $region16: #{fused_forward.1} parent=1 // pred_region
      _
    $region17: #{fused_forward.1} parent=1 // pred_fallthru
      _
    // Predicated region
    $region18: #{fused_forward.1} parent=1 // pred_check
      _
    $region19: #{fused_forward.1} parent=1 // pred_check_branch
      %30 = sbr.rel (0) target = $region21
    $region20: #{fused_forward.1} parent=1 // pred_region
      %31 = dma.done [#allocation3], 2432
    $region21: #{fused_forward.1} parent=1 // pred_fallthru
      _
    %v32 = vld [vmem:[#allocation2] sm:$0xff]
    %v33 = vld [vmem:[#allocation2 + $0x8] sm:$0xff]
    %v34 = vld [vmem:[#allocation2 + $0x10] sm:$0xff]
    %v35 = vld [vmem:[#allocation2 + $0x18] sm:$0xff]
    %v36 = vld [vmem:[#allocation2 + $0x20] sm:$0xff]
    %v37 = vld [vmem:[#allocation2 + $0x28] sm:$0xff]
    %v38 = vld [vmem:[#allocation2 + $0x30] sm:$0xff]
    %v39 = vld [vmem:[#allocation2 + $0x38] sm:$0xff]
    %v40 = vld [vmem:[#allocation2 + $0x40] sm:$0xff]
    %v41 = vld [vmem:[#allocation2 + $0x48] sm:$0xff]
    %v42 = vld [vmem:[#allocation2 + $0x50] sm:$0xff]
    %v43 = vld [vmem:[#allocation2 + $0x58] sm:$0xff]
    %v44 = vld [vmem:[#allocation2 + $0x60] sm:$0xff]
    %v45 = vld [vmem:[#allocation2 + $0x68] sm:$0xff]
    %v46 = vld [vmem:[#allocation2 + $0x70] sm:$0xff]
    %v47 = vld [vmem:[#allocation2 + $0x78] sm:$0xff]
    %v48 = vld [vmem:[#allocation2 + $0x80] sm:$0xff]
    %v49 = vld [vmem:[#allocation2 + $0x88] sm:$0xff]
    %v50 = vld [vmem:[#allocation2 + $0x90] sm:$0xff]
    %v51 = vld [vmem:[%s3] sm:$0x1]
    %v52 = vld [vmem:[%s3 + $0x1] sm:$0x1]
    %v53 = vld [vmem:[%s3 + $0x2] sm:$0x1]
    %v54 = vld [vmem:[%s3 + $0x3] sm:$0x1]
    %v55 = vld [vmem:[%s3 + $0x4] sm:$0x1]
    %v56 = vld [vmem:[%s3 + $0x5] sm:$0x1]
    %v57 = vld [vmem:[%s3 + $0x6] sm:$0x1]
    %v58 = vld [vmem:[%s0] sm:$0xff]
    %v59 = vld [vmem:[%s0 + $0x8] sm:$0xff]
    %v60 = vld [vmem:[%s0 + $0x10] sm:$0xff]
    %v61 = vld [vmem:[%s0 + $0x18] sm:$0xff]
    %v62 = vld [vmem:[%s0 + $0x20] sm:$0xff]
    %v63 = vld [vmem:[%s0 + $0x28] sm:$0xff]
    %v64 = vld [vmem:[%s0 + $0x30] sm:$0xff]
    %v65 = vld [vmem:[%s0 + $0x38] sm:$0xff]
    %v66 = vlaneseq
    %v67 = vshrl.u32 %v66, 7
    %v68 = vsub.s32 0, %v67
    %v69 = vrot.slane %v51, %v68
    %vm70 = vcmask 195584
    %v72 = vsel %vm70, %v58, 0
    %v75 = vsel %vm70, %v59, 0
    %v78 = vsel %vm70, %v60, 0
    %v81 = vsel %vm70, %v61, 0
    %v84 = vsel %vm70, %v62, 0
    %v87 = vsel %vm70, %v63, 0
    %v90 = vsel %vm70, %v64, 0
    %v93 = vsel %vm70, %v65, 0
    %95 = vmatprep.subr.mxu0 0.0
    %96 = vmatpush1.msra.mxu0 %v32
    %97 = vmatprep.subr.mxu0 0.0
    %98 = vmatpush1.msra.mxu0 %v33
    %99 = vmatprep.subr.mxu0 0.0
    %100 = vmatpush1.msra.mxu0 %v34
    %101 = vmatprep.subr.mxu0 0.0
    %102 = vmatpush1.msra.mxu0 0.0
    %103 = vmatprep.subr.mxu0 0.0
    %104 = vmatpush1.msra.mxu0 0.0
    %105 = vmatprep.subr.mxu0 0.0
    %106 = vmatpush1.msra.mxu0 0.0
    %107 = vmatprep.subr.mxu0 0.0
    %108 = vmatpush1.msra.mxu0 0.0
    %109 = vmatprep.subr.mxu0 0.0
    %110 = vmatpush1.msra.mxu0 0.0
    %111 = vmatprep.subr.mxu0 0.0
    %112 = vmatpush1.msra.mxu0 0.0
    %113 = vmatprep.subr.mxu0 0.0
    %114 = vmatpush1.msra.mxu0 0.0
    %115 = vmatprep.subr.mxu0 0.0
    %116 = vmatpush1.msra.mxu0 0.0
    %117 = vmatprep.subr.mxu0 0.0
    %118 = vmatpush1.msra.mxu0 0.0
    %119 = vmatprep.subr.mxu0 0.0
    %120 = vmatpush1.msra.mxu0 0.0
    %121 = vmatprep.subr.mxu0 0.0
    %122 = vmatpush1.msra.mxu0 0.0
    %123 = vmatprep.subr.mxu0 0.0
    %124 = vmatpush1.msra.mxu0 0.0
    %125 = vmatprep.subr.mxu0 0.0
    %126 = vmatpush1.msra.mxu0 0.0
    %127 = vmatprep.subr.mxu0 0.0
    %128 = vmatpush1.msra.mxu0 0.0
    %129 = vmatprep.subr.mxu0 0.0
    %130 = vmatpush1.msra.mxu0 0.0
    %131 = vmatprep.subr.mxu0 0.0
    %132 = vmatpush1.msra.mxu0 0.0
    %133 = vmatprep.subr.mxu0 0.0
    %134 = vmatpush1.msra.mxu0 0.0
    %135 = vmatprep.subr.mxu0 0.0
    %136 = vmatpush1.msra.mxu0 0.0
    %137 = vmatprep.subr.mxu0 0.0
    %138 = vmatpush1.msra.mxu0 0.0
    %139 = vmatprep.subr.mxu0 0.0
    %140 = vmatpush1.msra.mxu0 0.0
    %141 = vmatprep.subr.mxu0 0.0
    %142 = vmatpush1.msra.mxu0 0.0
    %143 = vmatprep.subr.mxu0 0.0
    %144 = vmatpush1.msra.mxu0 0.0
    %145 = vmatprep.subr.mxu0 0.0
    %146 = vmatpush1.msra.mxu0 0.0
    %147 = vmatprep.subr.mxu0 0.0
    %148 = vmatpush1.msra.mxu0 0.0
    %149 = vmatprep.subr.mxu0 0.0
    %150 = vmatpush1.msra.mxu0 0.0
    %151 = vmatprep.subr.mxu0 0.0
    %152 = vmatpush1.msra.mxu0 0.0
    %153 = vmatprep.subr.mxu0 0.0
    %154 = vmatpush1.msra.mxu0 0.0
    %155 = vmatprep.subr.mxu0 0.0
    %156 = vmatpush1.msra.mxu0 0.0
    %157 = vmatprep.subr.mxu0 0.0
    %158 = vmatpush1.msra.mxu0 0.0
    %159 = vmatprep.mubr.f32.mxu0 0.0
    %160 = vmatmul.mubr.f32.gmra.mrb[0].mxu0 %v72
    %v161 = vpop.f32.mrb[0].mxu0
    %v162 = vadd.f32 %v69, %v161
    %v163 = vpop.f32.mrb[0].mxu0
    %164 = vmatprep.mubr.f32.mxu0 0.0
    %165 = vmatmul.mubr.f32.gmra.mrb[0].mxu0 %v75
    %v166 = vpop.f32.mrb[0].mxu0
    %v167 = vadd.f32 %v69, %v166
    %v168 = vpop.f32.mrb[0].mxu0
    %169 = vmatprep.mubr.f32.mxu0 0.0
    %170 = vmatmul.mubr.f32.gmra.mrb[0].mxu0 %v78
    %v171 = vpop.f32.mrb[0].mxu0
    %v172 = vadd.f32 %v69, %v171
    %v173 = vpop.f32.mrb[0].mxu0
    %174 = vmatprep.mubr.f32.mxu0 0.0
    %175 = vmatmul.mubr.f32.gmra.mrb[0].mxu0 %v81
    %v176 = vpop.f32.mrb[0].mxu0
    %v177 = vadd.f32 %v69, %v176
    %v178 = vpop.f32.mrb[0].mxu0
    %179 = vmatprep.mubr.f32.mxu0 0.0
    %180 = vmatmul.mubr.f32.gmra.mrb[0].mxu0 %v84
    %v181 = vpop.f32.mrb[0].mxu0
    %v182 = vadd.f32 %v69, %v181
    %v183 = vpop.f32.mrb[0].mxu0
    %184 = vmatprep.mubr.f32.mxu0 0.0
    %185 = vmatmul.mubr.f32.gmra.mrb[0].mxu0 %v87
    %v186 = vpop.f32.mrb[0].mxu0
    %v187 = vadd.f32 %v69, %v186
    %v188 = vpop.f32.mrb[0].mxu0
    %189 = vmatprep.mubr.f32.mxu0 0.0
    %190 = vmatmul.mubr.f32.gmra.mrb[0].mxu0 %v90
    %v191 = vpop.f32.mrb[0].mxu0
    %v192 = vadd.f32 %v69, %v191
    %v193 = vpop.f32.mrb[0].mxu0
    %194 = vmatprep.mubr.f32.mxu0 0.0
    %195 = vmatmul.mubr.f32.gmra.mrb[0].mxu0 %v93
    %v196 = vpop.f32.mrb[0].mxu0
    %v197 = vadd.f32 %v69, %v196
    %v198 = vpop.f32.mrb[0].mxu0
    %199 = vdwg.mxu0
    %vm200 = vcmask 261120
    %v201 = vsel %vm200, %v162, 0.0
    %202 = vadd.xlane.f32.xlu0 %v201
    %v203 = vpop.xlane.xlu0 %202
    %v204 = vsel %vm200, %v167, 0.0
    %205 = vadd.xlane.f32.xlu0 %v204
    %v206 = vpop.xlane.xlu0 %205
    %v207 = vsel %vm200, %v172, 0.0
    %208 = vadd.xlane.f32.xlu0 %v207
    %v209 = vpop.xlane.xlu0 %208
    %v210 = vsel %vm200, %v177, 0.0
    %211 = vadd.xlane.f32.xlu0 %v210
    %v212 = vpop.xlane.xlu0 %211
    %v213 = vsel %vm200, %v182, 0.0
    %214 = vadd.xlane.f32.xlu0 %v213
    %v215 = vpop.xlane.xlu0 %214
    %v216 = vsel %vm200, %v187, 0.0
    %217 = vadd.xlane.f32.xlu0 %v216
    %v218 = vpop.xlane.xlu0 %217
    %v219 = vsel %vm200, %v192, 0.0
    %220 = vadd.xlane.f32.xlu0 %v219
    %v221 = vpop.xlane.xlu0 %220
    %v222 = vsel %vm200, %v197, 0.0
    %223 = vadd.xlane.f32.xlu0 %v222
    %v224 = vpop.xlane.xlu0 %223
    %v225 = vrcp.pop 32.0
    %v226 = vmul.f32 %v203, %v225
    %v227 = vmul.f32 %v206, %v225
    %v228 = vmul.f32 %v209, %v225
    %v229 = vmul.f32 %v212, %v225
    %v230 = vmul.f32 %v215, %v225
    %v231 = vmul.f32 %v218, %v225
    %v232 = vmul.f32 %v221, %v225
    %v233 = vmul.f32 %v224, %v225
    %v234 = vsub.f32 %v162, %v226
    %v235 = vsub.f32 %v167, %v227
    %v236 = vsub.f32 %v172, %v228
    %v237 = vsub.f32 %v177, %v229
    %v238 = vsub.f32 %v182, %v230
    %v239 = vsub.f32 %v187, %v231
    %v240 = vsub.f32 %v192, %v232
    %v241 = vsub.f32 %v197, %v233
    %v242 = vmul.f32 %v234, %v234
    %v243 = vmul.f32 %v235, %v235
    %v244 = vmul.f32 %v236, %v236
    %v245 = vmul.f32 %v237, %v237
    %v246 = vmul.f32 %v238, %v238
    %v247 = vmul.f32 %v239, %v239
    %v248 = vmul.f32 %v240, %v240
    %v249 = vmul.f32 %v241, %v241
    %v250 = vsel %vm200, %v242, 0.0
    %251 = vadd.xlane.f32.xlu0 %v250
    %v252 = vpop.xlane.xlu0 %251
    %v253 = vsel %vm200, %v243, 0.0
    %254 = vadd.xlane.f32.xlu0 %v253
    %v255 = vpop.xlane.xlu0 %254
    %v256 = vsel %vm200, %v244, 0.0
    %257 = vadd.xlane.f32.xlu0 %v256
    %v258 = vpop.xlane.xlu0 %257
    %v259 = vsel %vm200, %v245, 0.0
    %260 = vadd.xlane.f32.xlu0 %v259
    %v261 = vpop.xlane.xlu0 %260
    %v262 = vsel %vm200, %v246, 0.0
    %263 = vadd.xlane.f32.xlu0 %v262
    %v264 = vpop.xlane.xlu0 %263
    %v265 = vsel %vm200, %v247, 0.0
    %266 = vadd.xlane.f32.xlu0 %v265
    %v267 = vpop.xlane.xlu0 %266
    %v268 = vsel %vm200, %v248, 0.0
    %269 = vadd.xlane.f32.xlu0 %v268
    %v270 = vpop.xlane.xlu0 %269
    %v271 = vsel %vm200, %v249, 0.0
    %272 = vadd.xlane.f32.xlu0 %v271
    %v273 = vpop.xlane.xlu0 %272
    %v274 = vmul.f32 %v252, %v225
    %v275 = vmul.f32 %v255, %v225
    %v276 = vmul.f32 %v258, %v225
    %v277 = vmul.f32 %v261, %v225
    %v278 = vmul.f32 %v264, %v225
    %v279 = vmul.f32 %v267, %v225
    %v280 = vmul.f32 %v270, %v225
    %v281 = vmul.f32 %v273, %v225
    %v282 = vadd.f32 %v274, 1e-05
    %v283 = vadd.f32 %v275, 1e-05
    %v284 = vadd.f32 %v276, 1e-05
    %v285 = vadd.f32 %v277, 1e-05
    %v286 = vadd.f32 %v278, 1e-05
    %v287 = vadd.f32 %v279, 1e-05
    %v288 = vadd.f32 %v280, 1e-05
    %v289 = vadd.f32 %v281, 1e-05
    %v290 = vrsqrt.pop %v282
    %v291 = vrsqrt.pop %v283
    %v292 = vrsqrt.pop %v284
    %v293 = vrsqrt.pop %v285
    %v294 = vrsqrt.pop %v286
    %v295 = vrsqrt.pop %v287
    %v296 = vrsqrt.pop %v288
    %v297 = vrsqrt.pop %v289
    %v298 = vmul.f32 %v234, %v290
    %v299 = vmul.f32 %v235, %v291
    %v300 = vmul.f32 %v236, %v292
    %v301 = vmul.f32 %v237, %v293
    %v302 = vmul.f32 %v238, %v294
    %v303 = vmul.f32 %v239, %v295
    %v304 = vmul.f32 %v240, %v296
    %v305 = vmul.f32 %v241, %v297
    %v306 = vlaneseq
    %v307 = vshrl.u32 %v306, 7
    %v308 = vsub.s32 0, %v307
    %v309 = vrot.slane %v52, %v308
    %v310 = vmul.f32 %v298, %v309
    %v311 = vmul.f32 %v299, %v309
    %v312 = vmul.f32 %v300, %v309
    %v313 = vmul.f32 %v301, %v309
    %v314 = vmul.f32 %v302, %v309
    %v315 = vmul.f32 %v303, %v309
    %v316 = vmul.f32 %v304, %v309
    %v317 = vmul.f32 %v305, %v309
    %v318 = vlaneseq
    %v319 = vshrl.u32 %v318, 7
    %v320 = vsub.s32 0, %v319
    %v321 = vrot.slane %v53, %v320
    %v322 = vadd.f32 %v310, %v321
    %v323 = vadd.f32 %v311, %v321
    %v324 = vadd.f32 %v312, %v321
    %v325 = vadd.f32 %v313, %v321
    %v326 = vadd.f32 %v314, %v321
    %v327 = vadd.f32 %v315, %v321
    %v328 = vadd.f32 %v316, %v321
    %v329 = vadd.f32 %v317, %v321
    %v330 = vtanh.pop %v322
    %v331 = vtanh.pop %v323
    %v332 = vtanh.pop %v324
    %v333 = vtanh.pop %v325
    %v334 = vtanh.pop %v326
    %v335 = vtanh.pop %v327
    %v336 = vtanh.pop %v328
    %v337 = vtanh.pop %v329
    %v338 = vlaneseq
    %v339 = vshrl.u32 %v338, 7
    %v340 = vsub.s32 0, %v339
    %v341 = vrot.slane %v54, %v340
    %v343 = vsel %vm200, %v330, 0
    %v346 = vsel %vm200, %v331, 0
    %v349 = vsel %vm200, %v332, 0
    %v352 = vsel %vm200, %v333, 0
    %v355 = vsel %vm200, %v334, 0
    %v358 = vsel %vm200, %v335, 0
    %v361 = vsel %vm200, %v336, 0
    %v364 = vsel %vm200, %v337, 0
    %366 = vmatprep.subr.mxu0 0.0
    %367 = vmatpush1.msra.mxu0 %v35
    %368 = vmatprep.subr.mxu0 0.0
    %369 = vmatpush1.msra.mxu0 %v36
    %370 = vmatprep.subr.mxu0 0.0
    %371 = vmatpush1.msra.mxu0 %v37
    %372 = vmatprep.subr.mxu0 0.0
    %373 = vmatpush1.msra.mxu0 %v38
    %374 = vmatprep.subr.mxu0 0.0
    %375 = vmatpush1.msra.mxu0 0.0
    %376 = vmatprep.subr.mxu0 0.0
    %377 = vmatpush1.msra.mxu0 0.0
    %378 = vmatprep.subr.mxu0 0.0
    %379 = vmatpush1.msra.mxu0 0.0
    %380 = vmatprep.subr.mxu0 0.0
    %381 = vmatpush1.msra.mxu0 0.0
    %382 = vmatprep.subr.mxu0 0.0
    %383 = vmatpush1.msra.mxu0 0.0
    %384 = vmatprep.subr.mxu0 0.0
    %385 = vmatpush1.msra.mxu0 0.0
    %386 = vmatprep.subr.mxu0 0.0
    %387 = vmatpush1.msra.mxu0 0.0
    %388 = vmatprep.subr.mxu0 0.0
    %389 = vmatpush1.msra.mxu0 0.0
    %390 = vmatprep.subr.mxu0 0.0
    %391 = vmatpush1.msra.mxu0 0.0
    %392 = vmatprep.subr.mxu0 0.0
    %393 = vmatpush1.msra.mxu0 0.0
    %394 = vmatprep.subr.mxu0 0.0
    %395 = vmatpush1.msra.mxu0 0.0
    %396 = vmatprep.subr.mxu0 0.0
    %397 = vmatpush1.msra.mxu0 0.0
    %398 = vmatprep.subr.mxu0 0.0
    %399 = vmatpush1.msra.mxu0 0.0
    %400 = vmatprep.subr.mxu0 0.0
    %401 = vmatpush1.msra.mxu0 0.0
    %402 = vmatprep.subr.mxu0 0.0
    %403 = vmatpush1.msra.mxu0 0.0
    %404 = vmatprep.subr.mxu0 0.0
    %405 = vmatpush1.msra.mxu0 0.0
    %406 = vmatprep.subr.mxu0 0.0
    %407 = vmatpush1.msra.mxu0 0.0
    %408 = vmatprep.subr.mxu0 0.0
    %409 = vmatpush1.msra.mxu0 0.0
    %410 = vmatprep.subr.mxu0 0.0
    %411 = vmatpush1.msra.mxu0 0.0
    %412 = vmatprep.subr.mxu0 0.0
    %413 = vmatpush1.msra.mxu0 0.0
    %414 = vmatprep.subr.mxu0 0.0
    %415 = vmatpush1.msra.mxu0 0.0
    %416 = vmatprep.subr.mxu0 0.0
    %417 = vmatpush1.msra.mxu0 0.0
    %418 = vmatprep.subr.mxu0 0.0
    %419 = vmatpush1.msra.mxu0 0.0
    %420 = vmatprep.subr.mxu0 0.0
    %421 = vmatpush1.msra.mxu0 0.0
    %422 = vmatprep.subr.mxu0 0.0
    %423 = vmatpush1.msra.mxu0 0.0
    %424 = vmatprep.subr.mxu0 0.0
    %425 = vmatpush1.msra.mxu0 0.0
    %426 = vmatprep.subr.mxu0 0.0
    %427 = vmatpush1.msra.mxu0 0.0
    %428 = vmatprep.subr.mxu0 0.0
    %429 = vmatpush1.msra.mxu0 0.0
    %430 = vmatprep.mubr.f32.mxu0 0.0
    %431 = vmatmul.mubr.f32.gmra.mrb[0].mxu0 %v343
    %v432 = vpop.f32.mrb[0].mxu0
    %v433 = vadd.f32 %v341, %v432
    %v434 = vpop.f32.mrb[0].mxu0
    %435 = vmatprep.mubr.f32.mxu0 0.0
    %436 = vmatmul.mubr.f32.gmra.mrb[0].mxu0 %v346
    %v437 = vpop.f32.mrb[0].mxu0
    %v438 = vadd.f32 %v341, %v437
    %v439 = vpop.f32.mrb[0].mxu0
    %440 = vmatprep.mubr.f32.mxu0 0.0
    %441 = vmatmul.mubr.f32.gmra.mrb[0].mxu0 %v349
    %v442 = vpop.f32.mrb[0].mxu0
    %v443 = vadd.f32 %v341, %v442
    %v444 = vpop.f32.mrb[0].mxu0
    %445 = vmatprep.mubr.f32.mxu0 0.0
    %446 = vmatmul.mubr.f32.gmra.mrb[0].mxu0 %v352
    %v447 = vpop.f32.mrb[0].mxu0
    %v448 = vadd.f32 %v341, %v447
    %v449 = vpop.f32.mrb[0].mxu0
    %450 = vmatprep.mubr.f32.mxu0 0.0
    %451 = vmatmul.mubr.f32.gmra.mrb[0].mxu0 %v355
    %v452 = vpop.f32.mrb[0].mxu0
    %v453 = vadd.f32 %v341, %v452
    %v454 = vpop.f32.mrb[0].mxu0
    %455 = vmatprep.mubr.f32.mxu0 0.0
    %456 = vmatmul.mubr.f32.gmra.mrb[0].mxu0 %v358
    %v457 = vpop.f32.mrb[0].mxu0
    %v458 = vadd.f32 %v341, %v457
    %v459 = vpop.f32.mrb[0].mxu0
    %460 = vmatprep.mubr.f32.mxu0 0.0
    %461 = vmatmul.mubr.f32.gmra.mrb[0].mxu0 %v361
    %v462 = vpop.f32.mrb[0].mxu0
    %v463 = vadd.f32 %v341, %v462
    %v464 = vpop.f32.mrb[0].mxu0
    %465 = vmatprep.mubr.f32.mxu0 0.0
    %466 = vmatmul.mubr.f32.gmra.mrb[0].mxu0 %v364
    %v467 = vpop.f32.mrb[0].mxu0
    %v468 = vadd.f32 %v341, %v467
    %v469 = vpop.f32.mrb[0].mxu0
    %470 = vdwg.mxu0
    %v471 = vld [vmem:[%s1] sm:$0xff]
    %v473 = vsel %vm200, %v471, 0
    %475 = vmatprep.subr.mxu0 0.0
    %476 = vmatpush1.msra.mxu0 %v39
    %477 = vmatprep.subr.mxu0 0.0
    %478 = vmatpush1.msra.mxu0 %v40
    %479 = vmatprep.subr.mxu0 0.0
    %480 = vmatpush1.msra.mxu0 %v41
    %481 = vmatprep.subr.mxu0 0.0
    %482 = vmatpush1.msra.mxu0 %v42
    %483 = vmatprep.subr.mxu0 0.0
    %484 = vmatpush1.msra.mxu0 0.0
    %485 = vmatprep.subr.mxu0 0.0
    %486 = vmatpush1.msra.mxu0 0.0
    %487 = vmatprep.subr.mxu0 0.0
    %488 = vmatpush1.msra.mxu0 0.0
    %489 = vmatprep.subr.mxu0 0.0
    %490 = vmatpush1.msra.mxu0 0.0
    %491 = vmatprep.subr.mxu0 0.0
    %492 = vmatpush1.msra.mxu0 0.0
    %493 = vmatprep.subr.mxu0 0.0
    %494 = vmatpush1.msra.mxu0 0.0
    %495 = vmatprep.subr.mxu0 0.0
    %496 = vmatpush1.msra.mxu0 0.0
    %497 = vmatprep.subr.mxu0 0.0
    %498 = vmatpush1.msra.mxu0 0.0
    %499 = vmatprep.subr.mxu0 0.0
    %500 = vmatpush1.msra.mxu0 0.0
    %501 = vmatprep.subr.mxu0 0.0
    %502 = vmatpush1.msra.mxu0 0.0
    %503 = vmatprep.subr.mxu0 0.0
    %504 = vmatpush1.msra.mxu0 0.0
    %505 = vmatprep.subr.mxu0 0.0
    %506 = vmatpush1.msra.mxu0 0.0
    %507 = vmatprep.subr.mxu0 0.0
    %508 = vmatpush1.msra.mxu0 0.0
    %509 = vmatprep.subr.mxu0 0.0
    %510 = vmatpush1.msra.mxu0 0.0
    %511 = vmatprep.subr.mxu0 0.0
    %512 = vmatpush1.msra.mxu0 0.0
    %513 = vmatprep.subr.mxu0 0.0
    %514 = vmatpush1.msra.mxu0 0.0
    %515 = vmatprep.subr.mxu0 0.0
    %516 = vmatpush1.msra.mxu0 0.0
    %517 = vmatprep.subr.mxu0 0.0
    %518 = vmatpush1.msra.mxu0 0.0
    %519 = vmatprep.subr.mxu0 0.0
    %520 = vmatpush1.msra.mxu0 0.0
    %521 = vmatprep.subr.mxu0 0.0
    %522 = vmatpush1.msra.mxu0 0.0
    %523 = vmatprep.subr.mxu0 0.0
    %524 = vmatpush1.msra.mxu0 0.0
    %525 = vmatprep.subr.mxu0 0.0
    %526 = vmatpush1.msra.mxu0 0.0
    %527 = vmatprep.subr.mxu0 0.0
    %528 = vmatpush1.msra.mxu0 0.0
    %529 = vmatprep.subr.mxu0 0.0
    %530 = vmatpush1.msra.mxu0 0.0
    %531 = vmatprep.subr.mxu0 0.0
    %532 = vmatpush1.msra.mxu0 0.0
    %533 = vmatprep.subr.mxu0 0.0
    %534 = vmatpush1.msra.mxu0 0.0
    %535 = vmatprep.subr.mxu0 0.0
    %536 = vmatpush1.msra.mxu0 0.0
    %537 = vmatprep.subr.mxu0 0.0
    %538 = vmatpush1.msra.mxu0 0.0
    %539 = vmatprep.mubr.f32.mxu0 0.0
    %540 = vmatmul.mubr.f32.gmra.mrb[0].mxu0 %v473
    %v541 = vpop.f32.mrb[0].mxu0
    %v542 = vadd.f32 0.0, %v541
    %v543 = vpop.f32.mrb[0].mxu0
    %544 = vdwg.mxu0
    %v545 = vadd.f32 %v433, %v542
    %v546 = vxor.u32 %v545, 2147483648
    %v547 = vmul.f32 %v546, 1.442695
    %v548 = vpow.pop %v547
    %v549 = vadd.f32 %v548, 1.0
    %v550 = vrcp.pop %v549
    %v551 = vmul.f32 1.0, %v550
    %v552 = vlaneseq
    %v553 = vshrl.u32 %v552, 7
    %v554 = vsub.s32 0, %v553
    %v555 = vrot.slane %v55, %v554
    %557 = vrot.lane.b32.xlu0 %v555, 64
    %v558 = vpop.permute.xlu0 %557
    %v560 = vadd.f32 %v542, %v558
    %562 = vrot.lane.b32.xlu0 %v560, 64
    %v563 = vpop.permute.xlu0 %562
    %v565 = vmul.f32 %v551, %v563
    %567 = vrot.lane.b32.xlu0 %v565, 64
    %v568 = vpop.permute.xlu0 %567
    %v570 = vadd.f32 %v433, %v568
    %v571 = vtanh.pop %v570
    %v572 = vsub.f32 1.0, %v551
    %574 = vrot.lane.b32.xlu0 %v571, 96
    %v575 = vpop.permute.xlu0 %574
    %v577 = vmul.f32 %v572, %v575
    %578 = vrot.lane.b32.xlu0 %v471, 32
    %v579 = vpop.permute.xlu0 %578
    %v581 = vmul.f32 %v551, %v579
    %v582 = vadd.f32 %v577, %v581
    %584 = vrot.lane.b32.xlu0 %v582, 96
    %v585 = vpop.permute.xlu0 %584
    %v586 = vsel %vm200, %v585, 0
    %588 = vmatprep.subr.mxu0 0.0
    %589 = vmatpush1.msra.mxu0 %v39
    %590 = vmatprep.subr.mxu0 0.0
    %591 = vmatpush1.msra.mxu0 %v40
    %592 = vmatprep.subr.mxu0 0.0
    %593 = vmatpush1.msra.mxu0 %v41
    %594 = vmatprep.subr.mxu0 0.0
    %595 = vmatpush1.msra.mxu0 %v42
    %596 = vmatprep.subr.mxu0 0.0
    %597 = vmatpush1.msra.mxu0 0.0
    %598 = vmatprep.subr.mxu0 0.0
    %599 = vmatpush1.msra.mxu0 0.0
    %600 = vmatprep.subr.mxu0 0.0
    %601 = vmatpush1.msra.mxu0 0.0
    %602 = vmatprep.subr.mxu0 0.0
    %603 = vmatpush1.msra.mxu0 0.0
    %604 = vmatprep.subr.mxu0 0.0
    %605 = vmatpush1.msra.mxu0 0.0
    %606 = vmatprep.subr.mxu0 0.0
    %607 = vmatpush1.msra.mxu0 0.0
    %608 = vmatprep.subr.mxu0 0.0
    %609 = vmatpush1.msra.mxu0 0.0
    %610 = vmatprep.subr.mxu0 0.0
    %611 = vmatpush1.msra.mxu0 0.0
    %612 = vmatprep.subr.mxu0 0.0
    %613 = vmatpush1.msra.mxu0 0.0
    %614 = vmatprep.subr.mxu0 0.0
    %615 = vmatpush1.msra.mxu0 0.0
    %616 = vmatprep.subr.mxu0 0.0
    %617 = vmatpush1.msra.mxu0 0.0
    %618 = vmatprep.subr.mxu0 0.0
    %619 = vmatpush1.msra.mxu0 0.0
    %620 = vmatprep.subr.mxu0 0.0
    %621 = vmatpush1.msra.mxu0 0.0
    %622 = vmatprep.subr.mxu0 0.0
    %623 = vmatpush1.msra.mxu0 0.0
    %624 = vmatprep.subr.mxu0 0.0
    %625 = vmatpush1.msra.mxu0 0.0
    %626 = vmatprep.subr.mxu0 0.0
    %627 = vmatpush1.msra.mxu0 0.0
    %628 = vmatprep.subr.mxu0 0.0
    %629 = vmatpush1.msra.mxu0 0.0
    %630 = vmatprep.subr.mxu0 0.0
    %631 = vmatpush1.msra.mxu0 0.0
    %632 = vmatprep.subr.mxu0 0.0
    %633 = vmatpush1.msra.mxu0 0.0
    %634 = vmatprep.subr.mxu0 0.0
    %635 = vmatpush1.msra.mxu0 0.0
    %636 = vmatprep.subr.mxu0 0.0
    %637 = vmatpush1.msra.mxu0 0.0
    %638 = vmatprep.subr.mxu0 0.0
    %639 = vmatpush1.msra.mxu0 0.0
    %640 = vmatprep.subr.mxu0 0.0
    %641 = vmatpush1.msra.mxu0 0.0
    %642 = vmatprep.subr.mxu0 0.0
    %643 = vmatpush1.msra.mxu0 0.0
    %644 = vmatprep.subr.mxu0 0.0
    %645 = vmatpush1.msra.mxu0 0.0
    %646 = vmatprep.subr.mxu0 0.0
    %647 = vmatpush1.msra.mxu0 0.0
    %648 = vmatprep.subr.mxu0 0.0
    %649 = vmatpush1.msra.mxu0 0.0
    %650 = vmatprep.subr.mxu0 0.0
    %651 = vmatpush1.msra.mxu0 0.0
    %652 = vmatprep.mubr.f32.mxu0 0.0
    %653 = vmatmul.mubr.f32.gmra.mrb[0].mxu0 %v586
    %v654 = vpop.f32.mrb[0].mxu0
    %v655 = vadd.f32 0.0, %v654
    %v656 = vpop.f32.mrb[0].mxu0
    %657 = vdwg.mxu0
    %v658 = vadd.f32 %v438, %v655
    %v659 = vxor.u32 %v658, 2147483648
    %v660 = vmul.f32 %v659, 1.442695
    %v661 = vpow.pop %v660
    %v662 = vadd.f32 %v661, 1.0
    %v663 = vrcp.pop %v662
    %v664 = vmul.f32 1.0, %v663
    %v665 = vadd.f32 %v655, %v558
    %667 = vrot.lane.b32.xlu0 %v665, 64
    %v668 = vpop.permute.xlu0 %667
    %v670 = vmul.f32 %v664, %v668
    %672 = vrot.lane.b32.xlu0 %v670, 64
    %v673 = vpop.permute.xlu0 %672
    %v675 = vadd.f32 %v438, %v673
    %v676 = vtanh.pop %v675
    %v677 = vsub.f32 1.0, %v664
    %679 = vrot.lane.b32.xlu0 %v676, 96
    %v680 = vpop.permute.xlu0 %679
    %v682 = vmul.f32 %v677, %v680
    %v683 = vmul.f32 %v664, %v582
    %v684 = vadd.f32 %v682, %v683
    %686 = vrot.lane.b32.xlu0 %v684, 96
    %v687 = vpop.permute.xlu0 %686
    %v688 = vsel %vm200, %v687, 0
    %690 = vmatprep.subr.mxu0 0.0
    %691 = vmatpush1.msra.mxu0 %v39
    %692 = vmatprep.subr.mxu0 0.0
    %693 = vmatpush1.msra.mxu0 %v40
    %694 = vmatprep.subr.mxu0 0.0
    %695 = vmatpush1.msra.mxu0 %v41
    %696 = vmatprep.subr.mxu0 0.0
    %697 = vmatpush1.msra.mxu0 %v42
    %698 = vmatprep.subr.mxu0 0.0
    %699 = vmatpush1.msra.mxu0 0.0
    %700 = vmatprep.subr.mxu0 0.0
    %701 = vmatpush1.msra.mxu0 0.0
    %702 = vmatprep.subr.mxu0 0.0
    %703 = vmatpush1.msra.mxu0 0.0
    %704 = vmatprep.subr.mxu0 0.0
    %705 = vmatpush1.msra.mxu0 0.0
    %706 = vmatprep.subr.mxu0 0.0
    %707 = vmatpush1.msra.mxu0 0.0
    %708 = vmatprep.subr.mxu0 0.0
    %709 = vmatpush1.msra.mxu0 0.0
    %710 = vmatprep.subr.mxu0 0.0
    %711 = vmatpush1.msra.mxu0 0.0
    %712 = vmatprep.subr.mxu0 0.0
    %713 = vmatpush1.msra.mxu0 0.0
    %714 = vmatprep.subr.mxu0 0.0
    %715 = vmatpush1.msra.mxu0 0.0
    %716 = vmatprep.subr.mxu0 0.0
    %717 = vmatpush1.msra.mxu0 0.0
    %718 = vmatprep.subr.mxu0 0.0
    %719 = vmatpush1.msra.mxu0 0.0
    %720 = vmatprep.subr.mxu0 0.0
    %721 = vmatpush1.msra.mxu0 0.0
    %722 = vmatprep.subr.mxu0 0.0
    %723 = vmatpush1.msra.mxu0 0.0
    %724 = vmatprep.subr.mxu0 0.0
    %725 = vmatpush1.msra.mxu0 0.0
    %726 = vmatprep.subr.mxu0 0.0
    %727 = vmatpush1.msra.mxu0 0.0
    %728 = vmatprep.subr.mxu0 0.0
    %729 = vmatpush1.msra.mxu0 0.0
    %730 = vmatprep.subr.mxu0 0.0
    %731 = vmatpush1.msra.mxu0 0.0
    %732 = vmatprep.subr.mxu0 0.0
    %733 = vmatpush1.msra.mxu0 0.0
    %734 = vmatprep.subr.mxu0 0.0
    %735 = vmatpush1.msra.mxu0 0.0
    %736 = vmatprep.subr.mxu0 0.0
    %737 = vmatpush1.msra.mxu0 0.0
    %738 = vmatprep.subr.mxu0 0.0
    %739 = vmatpush1.msra.mxu0 0.0
    %740 = vmatprep.subr.mxu0 0.0
    %741 = vmatpush1.msra.mxu0 0.0
    %742 = vmatprep.subr.mxu0 0.0
    %743 = vmatpush1.msra.mxu0 0.0
    %744 = vmatprep.subr.mxu0 0.0
    %745 = vmatpush1.msra.mxu0 0.0
    %746 = vmatprep.subr.mxu0 0.0
    %747 = vmatpush1.msra.mxu0 0.0
    %748 = vmatprep.subr.mxu0 0.0
    %749 = vmatpush1.msra.mxu0 0.0
    %750 = vmatprep.subr.mxu0 0.0
    %751 = vmatpush1.msra.mxu0 0.0
    %752 = vmatprep.subr.mxu0 0.0
    %753 = vmatpush1.msra.mxu0 0.0
    %754 = vmatprep.mubr.f32.mxu0 0.0
    %755 = vmatmul.mubr.f32.gmra.mrb[0].mxu0 %v688
    %v756 = vpop.f32.mrb[0].mxu0
    %v757 = vadd.f32 0.0, %v756
    %v758 = vpop.f32.mrb[0].mxu0
    %759 = vdwg.mxu0
    %v760 = vadd.f32 %v443, %v757
    %v761 = vxor.u32 %v760, 2147483648
    %v762 = vmul.f32 %v761, 1.442695
    %v763 = vpow.pop %v762
    %v764 = vadd.f32 %v763, 1.0
    %v765 = vrcp.pop %v764
    %v766 = vmul.f32 1.0, %v765
    %v767 = vadd.f32 %v757, %v558
    %769 = vrot.lane.b32.xlu0 %v767, 64
    %v770 = vpop.permute.xlu0 %769
    %v772 = vmul.f32 %v766, %v770
    %774 = vrot.lane.b32.xlu0 %v772, 64
    %v775 = vpop.permute.xlu0 %774
    %v777 = vadd.f32 %v443, %v775
    %v778 = vtanh.pop %v777
    %v779 = vsub.f32 1.0, %v766
    %781 = vrot.lane.b32.xlu0 %v778, 96
    %v782 = vpop.permute.xlu0 %781
    %v784 = vmul.f32 %v779, %v782
    %v785 = vmul.f32 %v766, %v684
    %v786 = vadd.f32 %v784, %v785
    %788 = vrot.lane.b32.xlu0 %v786, 96
    %v789 = vpop.permute.xlu0 %788
    %v790 = vsel %vm200, %v789, 0
    %792 = vmatprep.subr.mxu0 0.0
    %793 = vmatpush1.msra.mxu0 %v39
    %794 = vmatprep.subr.mxu0 0.0
    %795 = vmatpush1.msra.mxu0 %v40
    %796 = vmatprep.subr.mxu0 0.0
    %797 = vmatpush1.msra.mxu0 %v41
    %798 = vmatprep.subr.mxu0 0.0
    %799 = vmatpush1.msra.mxu0 %v42
    %800 = vmatprep.subr.mxu0 0.0
    %801 = vmatpush1.msra.mxu0 0.0
    %802 = vmatprep.subr.mxu0 0.0
    %803 = vmatpush1.msra.mxu0 0.0
    %804 = vmatprep.subr.mxu0 0.0
    %805 = vmatpush1.msra.mxu0 0.0
    %806 = vmatprep.subr.mxu0 0.0
    %807 = vmatpush1.msra.mxu0 0.0
    %808 = vmatprep.subr.mxu0 0.0
    %809 = vmatpush1.msra.mxu0 0.0
    %810 = vmatprep.subr.mxu0 0.0
    %811 = vmatpush1.msra.mxu0 0.0
    %812 = vmatprep.subr.mxu0 0.0
    %813 = vmatpush1.msra.mxu0 0.0
    %814 = vmatprep.subr.mxu0 0.0
    %815 = vmatpush1.msra.mxu0 0.0
    %816 = vmatprep.subr.mxu0 0.0
    %817 = vmatpush1.msra.mxu0 0.0
    %818 = vmatprep.subr.mxu0 0.0
    %819 = vmatpush1.msra.mxu0 0.0
    %820 = vmatprep.subr.mxu0 0.0
    %821 = vmatpush1.msra.mxu0 0.0
    %822 = vmatprep.subr.mxu0 0.0
    %823 = vmatpush1.msra.mxu0 0.0
    %824 = vmatprep.subr.mxu0 0.0
    %825 = vmatpush1.msra.mxu0 0.0
    %826 = vmatprep.subr.mxu0 0.0
    %827 = vmatpush1.msra.mxu0 0.0
    %828 = vmatprep.subr.mxu0 0.0
    %829 = vmatpush1.msra.mxu0 0.0
    %830 = vmatprep.subr.mxu0 0.0
    %831 = vmatpush1.msra.mxu0 0.0
    %832 = vmatprep.subr.mxu0 0.0
    %833 = vmatpush1.msra.mxu0 0.0
    %834 = vmatprep.subr.mxu0 0.0
    %835 = vmatpush1.msra.mxu0 0.0
    %836 = vmatprep.subr.mxu0 0.0
    %837 = vmatpush1.msra.mxu0 0.0
    %838 = vmatprep.subr.mxu0 0.0
    %839 = vmatpush1.msra.mxu0 0.0
    %840 = vmatprep.subr.mxu0 0.0
    %841 = vmatpush1.msra.mxu0 0.0
    %842 = vmatprep.subr.mxu0 0.0
    %843 = vmatpush1.msra.mxu0 0.0
    %844 = vmatprep.subr.mxu0 0.0
    %845 = vmatpush1.msra.mxu0 0.0
    %846 = vmatprep.subr.mxu0 0.0
    %847 = vmatpush1.msra.mxu0 0.0
    %848 = vmatprep.subr.mxu0 0.0
    %849 = vmatpush1.msra.mxu0 0.0
    %850 = vmatprep.subr.mxu0 0.0
    %851 = vmatpush1.msra.mxu0 0.0
    %852 = vmatprep.subr.mxu0 0.0
    %853 = vmatpush1.msra.mxu0 0.0
    %854 = vmatprep.subr.mxu0 0.0
    %855 = vmatpush1.msra.mxu0 0.0
    %856 = vmatprep.mubr.f32.mxu0 0.0
    %857 = vmatmul.mubr.f32.gmra.mrb[0].mxu0 %v790
    %v858 = vpop.f32.mrb[0].mxu0
    %v859 = vadd.f32 0.0, %v858
    %v860 = vpop.f32.mrb[0].mxu0
    %861 = vdwg.mxu0
    %v862 = vadd.f32 %v448, %v859
    %v863 = vxor.u32 %v862, 2147483648
    %v864 = vmul.f32 %v863, 1.442695
    %v865 = vpow.pop %v864
    %v866 = vadd.f32 %v865, 1.0
    %v867 = vrcp.pop %v866
    %v868 = vmul.f32 1.0, %v867
    %v869 = vadd.f32 %v859, %v558
    %871 = vrot.lane.b32.xlu0 %v869, 64
    %v872 = vpop.permute.xlu0 %871
    %v874 = vmul.f32 %v868, %v872
    %876 = vrot.lane.b32.xlu0 %v874, 64
    %v877 = vpop.permute.xlu0 %876
    %v879 = vadd.f32 %v448, %v877
    %v880 = vtanh.pop %v879
    %v881 = vsub.f32 1.0, %v868
    %883 = vrot.lane.b32.xlu0 %v880, 96
    %v884 = vpop.permute.xlu0 %883
    %v886 = vmul.f32 %v881, %v884
    %v887 = vmul.f32 %v868, %v786
    %v888 = vadd.f32 %v886, %v887
    %890 = vrot.lane.b32.xlu0 %v888, 96
    %v891 = vpop.permute.xlu0 %890
    %v892 = vsel %vm200, %v891, 0
    %894 = vmatprep.subr.mxu0 0.0
    %895 = vmatpush1.msra.mxu0 %v39
    %896 = vmatprep.subr.mxu0 0.0
    %897 = vmatpush1.msra.mxu0 %v40
    %898 = vmatprep.subr.mxu0 0.0
    %899 = vmatpush1.msra.mxu0 %v41
    %900 = vmatprep.subr.mxu0 0.0
    %901 = vmatpush1.msra.mxu0 %v42
    %902 = vmatprep.subr.mxu0 0.0
    %903 = vmatpush1.msra.mxu0 0.0
    %904 = vmatprep.subr.mxu0 0.0
    %905 = vmatpush1.msra.mxu0 0.0
    %906 = vmatprep.subr.mxu0 0.0
    %907 = vmatpush1.msra.mxu0 0.0
    %908 = vmatprep.subr.mxu0 0.0
    %909 = vmatpush1.msra.mxu0 0.0
    %910 = vmatprep.subr.mxu0 0.0
    %911 = vmatpush1.msra.mxu0 0.0
    %912 = vmatprep.subr.mxu0 0.0
    %913 = vmatpush1.msra.mxu0 0.0
    %914 = vmatprep.subr.mxu0 0.0
    %915 = vmatpush1.msra.mxu0 0.0
    %916 = vmatprep.subr.mxu0 0.0
    %917 = vmatpush1.msra.mxu0 0.0
    %918 = vmatprep.subr.mxu0 0.0
    %919 = vmatpush1.msra.mxu0 0.0
    %920 = vmatprep.subr.mxu0 0.0
    %921 = vmatpush1.msra.mxu0 0.0
    %922 = vmatprep.subr.mxu0 0.0
    %923 = vmatpush1.msra.mxu0 0.0
    %924 = vmatprep.subr.mxu0 0.0
    %925 = vmatpush1.msra.mxu0 0.0
    %926 = vmatprep.subr.mxu0 0.0
    %927 = vmatpush1.msra.mxu0 0.0
    %928 = vmatprep.subr.mxu0 0.0
    %929 = vmatpush1.msra.mxu0 0.0
    %930 = vmatprep.subr.mxu0 0.0
    %931 = vmatpush1.msra.mxu0 0.0
    %932 = vmatprep.subr.mxu0 0.0
    %933 = vmatpush1.msra.mxu0 0.0
    %934 = vmatprep.subr.mxu0 0.0
    %935 = vmatpush1.msra.mxu0 0.0
    %936 = vmatprep.subr.mxu0 0.0
    %937 = vmatpush1.msra.mxu0 0.0
    %938 = vmatprep.subr.mxu0 0.0
    %939 = vmatpush1.msra.mxu0 0.0
    %940 = vmatprep.subr.mxu0 0.0
    %941 = vmatpush1.msra.mxu0 0.0
    %942 = vmatprep.subr.mxu0 0.0
    %943 = vmatpush1.msra.mxu0 0.0
    %944 = vmatprep.subr.mxu0 0.0
    %945 = vmatpush1.msra.mxu0 0.0
    %946 = vmatprep.subr.mxu0 0.0
    %947 = vmatpush1.msra.mxu0 0.0
    %948 = vmatprep.subr.mxu0 0.0
    %949 = vmatpush1.msra.mxu0 0.0
    %950 = vmatprep.subr.mxu0 0.0
    %951 = vmatpush1.msra.mxu0 0.0
    %952 = vmatprep.subr.mxu0 0.0
    %953 = vmatpush1.msra.mxu0 0.0
    %954 = vmatprep.subr.mxu0 0.0
    %955 = vmatpush1.msra.mxu0 0.0
    %956 = vmatprep.subr.mxu0 0.0
    %957 = vmatpush1.msra.mxu0 0.0
    %958 = vmatprep.mubr.f32.mxu0 0.0
    %959 = vmatmul.mubr.f32.gmra.mrb[0].mxu0 %v892
    %v960 = vpop.f32.mrb[0].mxu0
    %v961 = vadd.f32 0.0, %v960
    %v962 = vpop.f32.mrb[0].mxu0
    %963 = vdwg.mxu0
    %v964 = vadd.f32 %v453, %v961
    %v965 = vxor.u32 %v964, 2147483648
    %v966 = vmul.f32 %v965, 1.442695
    %v967 = vpow.pop %v966
    %v968 = vadd.f32 %v967, 1.0
    %v969 = vrcp.pop %v968
    %v970 = vmul.f32 1.0, %v969
    %v971 = vadd.f32 %v961, %v558
    %973 = vrot.lane.b32.xlu0 %v971, 64
    %v974 = vpop.permute.xlu0 %973
    %v976 = vmul.f32 %v970, %v974
    %978 = vrot.lane.b32.xlu0 %v976, 64
    %v979 = vpop.permute.xlu0 %978
    %v981 = vadd.f32 %v453, %v979
    %v982 = vtanh.pop %v981
    %v983 = vsub.f32 1.0, %v970
    %985 = vrot.lane.b32.xlu0 %v982, 96
    %v986 = vpop.permute.xlu0 %985
    %v988 = vmul.f32 %v983, %v986
    %v989 = vmul.f32 %v970, %v888
    %v990 = vadd.f32 %v988, %v989
    %992 = vrot.lane.b32.xlu0 %v990, 96
    %v993 = vpop.permute.xlu0 %992
    %v994 = vsel %vm200, %v993, 0
    %996 = vmatprep.subr.mxu0 0.0
    %997 = vmatpush1.msra.mxu0 %v39
    %998 = vmatprep.subr.mxu0 0.0
    %999 = vmatpush1.msra.mxu0 %v40
    %1000 = vmatprep.subr.mxu0 0.0
    %1001 = vmatpush1.msra.mxu0 %v41
    %1002 = vmatprep.subr.mxu0 0.0
    %1003 = vmatpush1.msra.mxu0 %v42
    %1004 = vmatprep.subr.mxu0 0.0
    %1005 = vmatpush1.msra.mxu0 0.0
    %1006 = vmatprep.subr.mxu0 0.0
    %1007 = vmatpush1.msra.mxu0 0.0
    %1008 = vmatprep.subr.mxu0 0.0
    %1009 = vmatpush1.msra.mxu0 0.0
    %1010 = vmatprep.subr.mxu0 0.0
    %1011 = vmatpush1.msra.mxu0 0.0
    %1012 = vmatprep.subr.mxu0 0.0
    %1013 = vmatpush1.msra.mxu0 0.0
    %1014 = vmatprep.subr.mxu0 0.0
    %1015 = vmatpush1.msra.mxu0 0.0
    %1016 = vmatprep.subr.mxu0 0.0
    %1017 = vmatpush1.msra.mxu0 0.0
    %1018 = vmatprep.subr.mxu0 0.0
    %1019 = vmatpush1.msra.mxu0 0.0
    %1020 = vmatprep.subr.mxu0 0.0
    %1021 = vmatpush1.msra.mxu0 0.0
    %1022 = vmatprep.subr.mxu0 0.0
    %1023 = vmatpush1.msra.mxu0 0.0
    %1024 = vmatprep.subr.mxu0 0.0
    %1025 = vmatpush1.msra.mxu0 0.0
    %1026 = vmatprep.subr.mxu0 0.0
    %1027 = vmatpush1.msra.mxu0 0.0
    %1028 = vmatprep.subr.mxu0 0.0
    %1029 = vmatpush1.msra.mxu0 0.0
    %1030 = vmatprep.subr.mxu0 0.0
    %1031 = vmatpush1.msra.mxu0 0.0
    %1032 = vmatprep.subr.mxu0 0.0
    %1033 = vmatpush1.msra.mxu0 0.0
    %1034 = vmatprep.subr.mxu0 0.0
    %1035 = vmatpush1.msra.mxu0 0.0
    %1036 = vmatprep.subr.mxu0 0.0
    %1037 = vmatpush1.msra.mxu0 0.0
    %1038 = vmatprep.subr.mxu0 0.0
    %1039 = vmatpush1.msra.mxu0 0.0
    %1040 = vmatprep.subr.mxu0 0.0
    %1041 = vmatpush1.msra.mxu0 0.0
    %1042 = vmatprep.subr.mxu0 0.0
    %1043 = vmatpush1.msra.mxu0 0.0
    %1044 = vmatprep.subr.mxu0 0.0
    %1045 = vmatpush1.msra.mxu0 0.0
    %1046 = vmatprep.subr.mxu0 0.0
    %1047 = vmatpush1.msra.mxu0 0.0
    %1048 = vmatprep.subr.mxu0 0.0
    %1049 = vmatpush1.msra.mxu0 0.0
    %1050 = vmatprep.subr.mxu0 0.0
    %1051 = vmatpush1.msra.mxu0 0.0
    %1052 = vmatprep.subr.mxu0 0.0
    %1053 = vmatpush1.msra.mxu0 0.0
    %1054 = vmatprep.subr.mxu0 0.0
    %1055 = vmatpush1.msra.mxu0 0.0
    %1056 = vmatprep.subr.mxu0 0.0
    %1057 = vmatpush1.msra.mxu0 0.0
    %1058 = vmatprep.subr.mxu0 0.0
    %1059 = vmatpush1.msra.mxu0 0.0
    %1060 = vmatprep.mubr.f32.mxu0 0.0
    %1061 = vmatmul.mubr.f32.gmra.mrb[0].mxu0 %v994
    %v1062 = vpop.f32.mrb[0].mxu0
    %v1063 = vadd.f32 0.0, %v1062
    %v1064 = vpop.f32.mrb[0].mxu0
    %1065 = vdwg.mxu0
    %v1066 = vadd.f32 %v458, %v1063
    %v1067 = vxor.u32 %v1066, 2147483648
    %v1068 = vmul.f32 %v1067, 1.442695
    %v1069 = vpow.pop %v1068
    %v1070 = vadd.f32 %v1069, 1.0
    %v1071 = vrcp.pop %v1070
    %v1072 = vmul.f32 1.0, %v1071
    %v1073 = vadd.f32 %v1063, %v558
    %1075 = vrot.lane.b32.xlu0 %v1073, 64
    %v1076 = vpop.permute.xlu0 %1075
    %v1078 = vmul.f32 %v1072, %v1076
    %1080 = vrot.lane.b32.xlu0 %v1078, 64
    %v1081 = vpop.permute.xlu0 %1080
    %v1083 = vadd.f32 %v458, %v1081
    %v1084 = vtanh.pop %v1083
    %v1085 = vsub.f32 1.0, %v1072
    %1087 = vrot.lane.b32.xlu0 %v1084, 96
    %v1088 = vpop.permute.xlu0 %1087
    %v1090 = vmul.f32 %v1085, %v1088
    %v1091 = vmul.f32 %v1072, %v990
    %v1092 = vadd.f32 %v1090, %v1091
    %1094 = vrot.lane.b32.xlu0 %v1092, 96
    %v1095 = vpop.permute.xlu0 %1094
    %v1096 = vsel %vm200, %v1095, 0
    %1098 = vmatprep.subr.mxu0 0.0
    %1099 = vmatpush1.msra.mxu0 %v39
    %1100 = vmatprep.subr.mxu0 0.0
    %1101 = vmatpush1.msra.mxu0 %v40
    %1102 = vmatprep.subr.mxu0 0.0
    %1103 = vmatpush1.msra.mxu0 %v41
    %1104 = vmatprep.subr.mxu0 0.0
    %1105 = vmatpush1.msra.mxu0 %v42
    %1106 = vmatprep.subr.mxu0 0.0
    %1107 = vmatpush1.msra.mxu0 0.0
    %1108 = vmatprep.subr.mxu0 0.0
    %1109 = vmatpush1.msra.mxu0 0.0
    %1110 = vmatprep.subr.mxu0 0.0
    %1111 = vmatpush1.msra.mxu0 0.0
    %1112 = vmatprep.subr.mxu0 0.0
    %1113 = vmatpush1.msra.mxu0 0.0
    %1114 = vmatprep.subr.mxu0 0.0
    %1115 = vmatpush1.msra.mxu0 0.0
    %1116 = vmatprep.subr.mxu0 0.0
    %1117 = vmatpush1.msra.mxu0 0.0
    %1118 = vmatprep.subr.mxu0 0.0
    %1119 = vmatpush1.msra.mxu0 0.0
    %1120 = vmatprep.subr.mxu0 0.0
    %1121 = vmatpush1.msra.mxu0 0.0
    %1122 = vmatprep.subr.mxu0 0.0
    %1123 = vmatpush1.msra.mxu0 0.0
    %1124 = vmatprep.subr.mxu0 0.0
    %1125 = vmatpush1.msra.mxu0 0.0
    %1126 = vmatprep.subr.mxu0 0.0
    %1127 = vmatpush1.msra.mxu0 0.0
    %1128 = vmatprep.subr.mxu0 0.0
    %1129 = vmatpush1.msra.mxu0 0.0
    %1130 = vmatprep.subr.mxu0 0.0
    %1131 = vmatpush1.msra.mxu0 0.0
    %1132 = vmatprep.subr.mxu0 0.0
    %1133 = vmatpush1.msra.mxu0 0.0
    %1134 = vmatprep.subr.mxu0 0.0
    %1135 = vmatpush1.msra.mxu0 0.0
    %1136 = vmatprep.subr.mxu0 0.0
    %1137 = vmatpush1.msra.mxu0 0.0
    %1138 = vmatprep.subr.mxu0 0.0
    %1139 = vmatpush1.msra.mxu0 0.0
    %1140 = vmatprep.subr.mxu0 0.0
    %1141 = vmatpush1.msra.mxu0 0.0
    %1142 = vmatprep.subr.mxu0 0.0
    %1143 = vmatpush1.msra.mxu0 0.0
    %1144 = vmatprep.subr.mxu0 0.0
    %1145 = vmatpush1.msra.mxu0 0.0
    %1146 = vmatprep.subr.mxu0 0.0
    %1147 = vmatpush1.msra.mxu0 0.0
    %1148 = vmatprep.subr.mxu0 0.0
    %1149 = vmatpush1.msra.mxu0 0.0
    %1150 = vmatprep.subr.mxu0 0.0
    %1151 = vmatpush1.msra.mxu0 0.0
    %1152 = vmatprep.subr.mxu0 0.0
    %1153 = vmatpush1.msra.mxu0 0.0
    %1154 = vmatprep.subr.mxu0 0.0
    %1155 = vmatpush1.msra.mxu0 0.0
    %1156 = vmatprep.subr.mxu0 0.0
    %1157 = vmatpush1.msra.mxu0 0.0
    %1158 = vmatprep.subr.mxu0 0.0
    %1159 = vmatpush1.msra.mxu0 0.0
    %1160 = vmatprep.subr.mxu0 0.0
    %1161 = vmatpush1.msra.mxu0 0.0
    %1162 = vmatprep.mubr.f32.mxu0 0.0
    %1163 = vmatmul.mubr.f32.gmra.mrb[0].mxu0 %v1096
    %v1164 = vpop.f32.mrb[0].mxu0
    %v1165 = vadd.f32 0.0, %v1164
    %v1166 = vpop.f32.mrb[0].mxu0
    %1167 = vdwg.mxu0
    %v1168 = vadd.f32 %v463, %v1165
    %v1169 = vxor.u32 %v1168, 2147483648
    %v1170 = vmul.f32 %v1169, 1.442695
    %v1171 = vpow.pop %v1170
    %v1172 = vadd.f32 %v1171, 1.0
    %v1173 = vrcp.pop %v1172
    %v1174 = vmul.f32 1.0, %v1173
    %v1175 = vadd.f32 %v1165, %v558
    %1177 = vrot.lane.b32.xlu0 %v1175, 64
    %v1178 = vpop.permute.xlu0 %1177
    %v1180 = vmul.f32 %v1174, %v1178
    %1182 = vrot.lane.b32.xlu0 %v1180, 64
    %v1183 = vpop.permute.xlu0 %1182
    %v1185 = vadd.f32 %v463, %v1183
    %v1186 = vtanh.pop %v1185
    %v1187 = vsub.f32 1.0, %v1174
    %1189 = vrot.lane.b32.xlu0 %v1186, 96
    %v1190 = vpop.permute.xlu0 %1189
    %v1192 = vmul.f32 %v1187, %v1190
    %v1193 = vmul.f32 %v1174, %v1092
    %v1194 = vadd.f32 %v1192, %v1193
    %1196 = vrot.lane.b32.xlu0 %v1194, 96
    %v1197 = vpop.permute.xlu0 %1196
    %v1198 = vsel %vm200, %v1197, 0
    %1200 = vmatprep.subr.mxu0 0.0
    %1201 = vmatpush1.msra.mxu0 %v39
    %1202 = vmatprep.subr.mxu0 0.0
    %1203 = vmatpush1.msra.mxu0 %v40
    %1204 = vmatprep.subr.mxu0 0.0
    %1205 = vmatpush1.msra.mxu0 %v41
    %1206 = vmatprep.subr.mxu0 0.0
    %1207 = vmatpush1.msra.mxu0 %v42
    %1208 = vmatprep.subr.mxu0 0.0
    %1209 = vmatpush1.msra.mxu0 0.0
    %1210 = vmatprep.subr.mxu0 0.0
    %1211 = vmatpush1.msra.mxu0 0.0
    %1212 = vmatprep.subr.mxu0 0.0
    %1213 = vmatpush1.msra.mxu0 0.0
    %1214 = vmatprep.subr.mxu0 0.0
    %1215 = vmatpush1.msra.mxu0 0.0
    %1216 = vmatprep.subr.mxu0 0.0
    %1217 = vmatpush1.msra.mxu0 0.0
    %1218 = vmatprep.subr.mxu0 0.0
    %1219 = vmatpush1.msra.mxu0 0.0
    %1220 = vmatprep.subr.mxu0 0.0
    %1221 = vmatpush1.msra.mxu0 0.0
    %1222 = vmatprep.subr.mxu0 0.0
    %1223 = vmatpush1.msra.mxu0 0.0
    %1224 = vmatprep.subr.mxu0 0.0
    %1225 = vmatpush1.msra.mxu0 0.0
    %1226 = vmatprep.subr.mxu0 0.0
    %1227 = vmatpush1.msra.mxu0 0.0
    %1228 = vmatprep.subr.mxu0 0.0
    %1229 = vmatpush1.msra.mxu0 0.0
    %1230 = vmatprep.subr.mxu0 0.0
    %1231 = vmatpush1.msra.mxu0 0.0
    %1232 = vmatprep.subr.mxu0 0.0
    %1233 = vmatpush1.msra.mxu0 0.0
    %1234 = vmatprep.subr.mxu0 0.0
    %1235 = vmatpush1.msra.mxu0 0.0
    %1236 = vmatprep.subr.mxu0 0.0
    %1237 = vmatpush1.msra.mxu0 0.0
    %1238 = vmatprep.subr.mxu0 0.0
    %1239 = vmatpush1.msra.mxu0 0.0
    %1240 = vmatprep.subr.mxu0 0.0
    %1241 = vmatpush1.msra.mxu0 0.0
    %1242 = vmatprep.subr.mxu0 0.0
    %1243 = vmatpush1.msra.mxu0 0.0
    %1244 = vmatprep.subr.mxu0 0.0
    %1245 = vmatpush1.msra.mxu0 0.0
    %1246 = vmatprep.subr.mxu0 0.0
    %1247 = vmatpush1.msra.mxu0 0.0
    %1248 = vmatprep.subr.mxu0 0.0
    %1249 = vmatpush1.msra.mxu0 0.0
    %1250 = vmatprep.subr.mxu0 0.0
    %1251 = vmatpush1.msra.mxu0 0.0
    %1252 = vmatprep.subr.mxu0 0.0
    %1253 = vmatpush1.msra.mxu0 0.0
    %1254 = vmatprep.subr.mxu0 0.0
    %1255 = vmatpush1.msra.mxu0 0.0
    %1256 = vmatprep.subr.mxu0 0.0
    %1257 = vmatpush1.msra.mxu0 0.0
    %1258 = vmatprep.subr.mxu0 0.0
    %1259 = vmatpush1.msra.mxu0 0.0
    %1260 = vmatprep.subr.mxu0 0.0
    %1261 = vmatpush1.msra.mxu0 0.0
    %1262 = vmatprep.subr.mxu0 0.0
    %1263 = vmatpush1.msra.mxu0 0.0
    %1264 = vmatprep.mubr.f32.mxu0 0.0
    %1265 = vmatmul.mubr.f32.gmra.mrb[0].mxu0 %v1198
    %v1266 = vpop.f32.mrb[0].mxu0
    %v1267 = vadd.f32 0.0, %v1266
    %v1268 = vpop.f32.mrb[0].mxu0
    %1269 = vdwg.mxu0
    %v1270 = vadd.f32 %v468, %v1267
    %v1271 = vxor.u32 %v1270, 2147483648
    %v1272 = vmul.f32 %v1271, 1.442695
    %v1273 = vpow.pop %v1272
    %v1274 = vadd.f32 %v1273, 1.0
    %v1275 = vrcp.pop %v1274
    %v1276 = vmul.f32 1.0, %v1275
    %v1277 = vadd.f32 %v1267, %v558
    %1279 = vrot.lane.b32.xlu0 %v1277, 64
    %v1280 = vpop.permute.xlu0 %1279
    %v1282 = vmul.f32 %v1276, %v1280
    %1284 = vrot.lane.b32.xlu0 %v1282, 64
    %v1285 = vpop.permute.xlu0 %1284
    %v1287 = vadd.f32 %v468, %v1285
    %v1288 = vtanh.pop %v1287
    %v1289 = vsub.f32 1.0, %v1276
    %1291 = vrot.lane.b32.xlu0 %v1288, 96
    %v1292 = vpop.permute.xlu0 %1291
    %v1294 = vmul.f32 %v1289, %v1292
    %v1295 = vmul.f32 %v1276, %v1194
    %v1296 = vadd.f32 %v1294, %v1295
    %v1297 = vlaneseq
    %v1298 = vshrl.u32 %v1297, 7
    %v1299 = vsub.s32 0, %v1298
    %v1300 = vrot.slane %v56, %v1299
    %1302 = vrot.lane.b32.xlu0 %v1296, 96
    %v1303 = vpop.permute.xlu0 %1302
    %v1304 = vsel %vm200, %v1303, 0
    %1306 = vmatprep.subr.mxu0 0.0
    %1307 = vmatpush1.msra.mxu0 %v43
    %1308 = vmatprep.subr.mxu0 0.0
    %1309 = vmatpush1.msra.mxu0 %v44
    %1310 = vmatprep.subr.mxu0 0.0
    %1311 = vmatpush1.msra.mxu0 %v45
    %1312 = vmatprep.subr.mxu0 0.0
    %1313 = vmatpush1.msra.mxu0 %v46
    %1314 = vmatprep.subr.mxu0 0.0
    %1315 = vmatpush1.msra.mxu0 0.0
    %1316 = vmatprep.subr.mxu0 0.0
    %1317 = vmatpush1.msra.mxu0 0.0
    %1318 = vmatprep.subr.mxu0 0.0
    %1319 = vmatpush1.msra.mxu0 0.0
    %1320 = vmatprep.subr.mxu0 0.0
    %1321 = vmatpush1.msra.mxu0 0.0
    %1322 = vmatprep.subr.mxu0 0.0
    %1323 = vmatpush1.msra.mxu0 0.0
    %1324 = vmatprep.subr.mxu0 0.0
    %1325 = vmatpush1.msra.mxu0 0.0
    %1326 = vmatprep.subr.mxu0 0.0
    %1327 = vmatpush1.msra.mxu0 0.0
    %1328 = vmatprep.subr.mxu0 0.0
    %1329 = vmatpush1.msra.mxu0 0.0
    %1330 = vmatprep.subr.mxu0 0.0
    %1331 = vmatpush1.msra.mxu0 0.0
    %1332 = vmatprep.subr.mxu0 0.0
    %1333 = vmatpush1.msra.mxu0 0.0
    %1334 = vmatprep.subr.mxu0 0.0
    %1335 = vmatpush1.msra.mxu0 0.0
    %1336 = vmatprep.subr.mxu0 0.0
    %1337 = vmatpush1.msra.mxu0 0.0
    %1338 = vmatprep.subr.mxu0 0.0
    %1339 = vmatpush1.msra.mxu0 0.0
    %1340 = vmatprep.subr.mxu0 0.0
    %1341 = vmatpush1.msra.mxu0 0.0
    %1342 = vmatprep.subr.mxu0 0.0
    %1343 = vmatpush1.msra.mxu0 0.0
    %1344 = vmatprep.subr.mxu0 0.0
    %1345 = vmatpush1.msra.mxu0 0.0
    %1346 = vmatprep.subr.mxu0 0.0
    %1347 = vmatpush1.msra.mxu0 0.0
    %1348 = vmatprep.subr.mxu0 0.0
    %1349 = vmatpush1.msra.mxu0 0.0
    %1350 = vmatprep.subr.mxu0 0.0
    %1351 = vmatpush1.msra.mxu0 0.0
    %1352 = vmatprep.subr.mxu0 0.0
    %1353 = vmatpush1.msra.mxu0 0.0
    %1354 = vmatprep.subr.mxu0 0.0
    %1355 = vmatpush1.msra.mxu0 0.0
    %1356 = vmatprep.subr.mxu0 0.0
    %1357 = vmatpush1.msra.mxu0 0.0
    %1358 = vmatprep.subr.mxu0 0.0
    %1359 = vmatpush1.msra.mxu0 0.0
    %1360 = vmatprep.subr.mxu0 0.0
    %1361 = vmatpush1.msra.mxu0 0.0
    %1362 = vmatprep.subr.mxu0 0.0
    %1363 = vmatpush1.msra.mxu0 0.0
    %1364 = vmatprep.subr.mxu0 0.0
    %1365 = vmatpush1.msra.mxu0 0.0
    %1366 = vmatprep.subr.mxu0 0.0
    %1367 = vmatpush1.msra.mxu0 0.0
    %1368 = vmatprep.subr.mxu0 0.0
    %1369 = vmatpush1.msra.mxu0 0.0
    %1370 = vmatprep.mubr.f32.mxu0 0.0
    %1371 = vmatmul.mubr.f32.gmra.mrb[0].mxu0 %v1304
    %v1372 = vpop.f32.mrb[0].mxu0
    %v1373 = vadd.f32 %v1300, %v1372
    %v1374 = vpop.f32.mrb[0].mxu0
    %1375 = vdwg.mxu0
    %v1376 = vmax.f32 %v1373, 0.0
    %v1377 = vlaneseq
    %v1378 = vshrl.u32 %v1377, 7
    %v1379 = vsub.s32 0, %v1378
    %v1380 = vrot.slane %v57, %v1379
    %v1382 = vsel %vm200, %v1376, 0
    %1384 = vmatprep.subr.mxu0 0.0
    %1385 = vmatpush1.msra.mxu0 %v47
    %1386 = vmatprep.subr.mxu0 0.0
    %1387 = vmatpush1.msra.mxu0 %v48
    %1388 = vmatprep.subr.mxu0 0.0
    %1389 = vmatpush1.msra.mxu0 %v49
    %1390 = vmatprep.subr.mxu0 0.0
    %1391 = vmatpush1.msra.mxu0 %v50
    %1392 = vmatprep.subr.mxu0 0.0
    %1393 = vmatpush1.msra.mxu0 0.0
    %1394 = vmatprep.subr.mxu0 0.0
    %1395 = vmatpush1.msra.mxu0 0.0
    %1396 = vmatprep.subr.mxu0 0.0
    %1397 = vmatpush1.msra.mxu0 0.0
    %1398 = vmatprep.subr.mxu0 0.0
    %1399 = vmatpush1.msra.mxu0 0.0
    %1400 = vmatprep.subr.mxu0 0.0
    %1401 = vmatpush1.msra.mxu0 0.0
    %1402 = vmatprep.subr.mxu0 0.0
    %1403 = vmatpush1.msra.mxu0 0.0
    %1404 = vmatprep.subr.mxu0 0.0
    %1405 = vmatpush1.msra.mxu0 0.0
    %1406 = vmatprep.subr.mxu0 0.0
    %1407 = vmatpush1.msra.mxu0 0.0
    %1408 = vmatprep.subr.mxu0 0.0
    %1409 = vmatpush1.msra.mxu0 0.0
    %1410 = vmatprep.subr.mxu0 0.0
    %1411 = vmatpush1.msra.mxu0 0.0
    %1412 = vmatprep.subr.mxu0 0.0
    %1413 = vmatpush1.msra.mxu0 0.0
    %1414 = vmatprep.subr.mxu0 0.0
    %1415 = vmatpush1.msra.mxu0 0.0
    %1416 = vmatprep.subr.mxu0 0.0
    %1417 = vmatpush1.msra.mxu0 0.0
    %1418 = vmatprep.subr.mxu0 0.0
    %1419 = vmatpush1.msra.mxu0 0.0
    %1420 = vmatprep.subr.mxu0 0.0
    %1421 = vmatpush1.msra.mxu0 0.0
    %1422 = vmatprep.subr.mxu0 0.0
    %1423 = vmatpush1.msra.mxu0 0.0
    %1424 = vmatprep.subr.mxu0 0.0
    %1425 = vmatpush1.msra.mxu0 0.0
    %1426 = vmatprep.subr.mxu0 0.0
    %1427 = vmatpush1.msra.mxu0 0.0
    %1428 = vmatprep.subr.mxu0 0.0
    %1429 = vmatpush1.msra.mxu0 0.0
    %1430 = vmatprep.subr.mxu0 0.0
    %1431 = vmatpush1.msra.mxu0 0.0
    %1432 = vmatprep.subr.mxu0 0.0
    %1433 = vmatpush1.msra.mxu0 0.0
    %1434 = vmatprep.subr.mxu0 0.0
    %1435 = vmatpush1.msra.mxu0 0.0
    %1436 = vmatprep.subr.mxu0 0.0
    %1437 = vmatpush1.msra.mxu0 0.0
    %1438 = vmatprep.subr.mxu0 0.0
    %1439 = vmatpush1.msra.mxu0 0.0
    %1440 = vmatprep.subr.mxu0 0.0
    %1441 = vmatpush1.msra.mxu0 0.0
    %1442 = vmatprep.subr.mxu0 0.0
    %1443 = vmatpush1.msra.mxu0 0.0
    %1444 = vmatprep.subr.mxu0 0.0
    %1445 = vmatpush1.msra.mxu0 0.0
    %1446 = vmatprep.subr.mxu0 0.0
    %1447 = vmatpush1.msra.mxu0 0.0
    %1448 = vmatprep.mubr.f32.mxu0 0.0
    %1449 = vmatmul.mubr.f32.gmra.mrb[0].mxu0 %v1382
    %v1450 = vpop.f32.mrb[0].mxu0
    %v1451 = vadd.f32 %v1380, %v1450
    %v1452 = vpop.f32.mrb[0].mxu0
    %1453 = vdwg.mxu0
    %1454 = vrot.lane.b32.xlu0 %v1296, 112
    %v1455 = vpop.permute.xlu0 %1454
    %vm1457 = vcmask 130048
    %v1458 = vsel %vm1457, %v1451, %v1455
    %vm1459 = vcmask 392192
    %1460 = vst.msk [vmem:[#allocation5] sm:$0xff] %vm1459, %v1458
    // Predicated region
    $region22: #{fused_forward.1} parent=1 // pred_check
      _
    $region23: #{fused_forward.1} parent=1 // pred_check_branch
      %1462 = sbr.rel (0) target = $region25
    $region24: #{fused_forward.1} parent=1 // pred_region
      %s1464 = ssub.s32 128, 128
      %1465 = vsyncadd [#allocation4], %s1464
      %s1467 = sshll.u32 [#allocation5], 4
      %s1468 = int_to_ptr.vmem [resolvable:$true] %s1467
      %1470 = dma.vmem_to_hbm [thread:$0]  %s1468, 128, %s4, [#allocation4]
    $region25: #{fused_forward.1} parent=1 // pred_fallthru
      _
    // Predicated region
    $region26: #{fused_forward.1} parent=1 // pred_check
      _
    $region27: #{fused_forward.1} parent=1 // pred_check_branch
      %1472 = sbr.rel (0) target = $region29
    $region28: #{fused_forward.1} parent=1 // pred_region
      %1473 = dma.done [#allocation4], 128
    $region29: #{fused_forward.1} parent=1 // pred_fallthru
      _
    %1474 = vsyncpa [#allocation3], 1
    %1475 = vsyncpa [#allocation4], 1

</llo_original>
